<compile_context>
chip_gen: v7x
topology: tpu7x:2x2x1
jax: 0.10.0
libtpu: 0.0.40
codegen_flags: <defaults>
</compile_context>

<pallas_src>
import numpy as np
import jax
import jax.numpy as jnp
from jax.experimental import pallas as pl
from jax.experimental.pallas import tpu as pltpu  # noqa: F401  (kept for TPU-specific tuning hooks)

# Problem sizes implied by the module (length 150 makes the final feature
# map exactly (16, 4) -> Linear(16*4, 32)).
B = 2
C_IN = 22
L_IN = 150
K1 = 5
L1 = (L_IN - K1) // 2 + 1     # 73   conv1 (k=5, stride=2)
P1 = L1 // 3                  # 24   maxpool k=3
L2 = P1 - 3 + 1               # 22   conv2 (k=3)
P2 = L2 // 2                  # 11   maxpool k=2
L3 = P2 - 3 + 1               # 9    conv3 (k=3)
P3 = L3 // 2                  # 4    maxpool k=2


# ------------------------------ kernel ------------------------------------
def net1_kernel(x_ref, w1_ref, b1_ref, w2_ref, b2_ref, w3_ref, b3_ref,
                wf1_ref, bf1_ref, wf2_ref, bf2_ref,
                sel1_ref, sel2_ref, selh_ref, out_ref):
    batch = x_ref.shape[0]

    def mm(a, b):
        return jnp.dot(a, b, preferred_element_type=jnp.float32)

    def shl(h, k):
        # Circular left shift by k along the lane axis.  Columns that wrap
        # across a sample boundary are never picked by the following
        # selection matmul, so the wrap is harmless.
        return jnp.concatenate([h[:, k:], h[:, :k]], axis=1)

    # ---- lane-batch the samples: (B, 22, 150) -> (22, B*150)
    xb = jnp.concatenate([x_ref[s] for s in range(batch)], axis=1)

    # ---- conv1 (Conv1d 22->32, k=5, stride=2) + ReLU + MaxPool(3)
    # Per-tap matmuls at stride 1 (keeps sublane blocks aligned); the
    # stride-2 subsampling AND the pool-3 window selection are folded into
    # the single sel1 matmul (columns t = s*150 + 6q).
    a1 = b1_ref[...] + mm(w1_ref[0], xb)
    for k in range(1, K1):
        a1 = a1 + mm(w1_ref[k], shl(xb, k))
    a1 = jnp.maximum(a1, 0.0)                                   # (32, B*150)
    r1 = jnp.maximum(a1, jnp.maximum(shl(a1, 2), shl(a1, 4)))   # max over window
    h1 = mm(r1, sel1_ref[...])                                  # (32, B*24)

    # ---- conv2 (Conv1d 32->16, k=3) + ReLU + MaxPool(2): ONE tap-stacked matmul
    s2 = jnp.concatenate([h1, shl(h1, 1), shl(h1, 2)], axis=0)  # (96, B*24)
    a2 = jnp.maximum(mm(w2_ref[...], s2) + b2_ref[...], 0.0)    # (16, B*24)
    r2 = jnp.maximum(a2, shl(a2, 1))
    h2 = mm(r2, sel2_ref[...])                                  # (16, B*11)

    # ---- conv3 (Conv1d 16->16, k=3) + ReLU + MaxPool(2): ONE tap-stacked matmul;
    # the pool-3 selection also gathers the head rhs in (position, sample) order.
    s3 = jnp.concatenate([h2, shl(h2, 1), shl(h2, 2)], axis=0)  # (48, B*11)
    a3 = jnp.maximum(mm(w3_ref[...], s3) + b3_ref[...], 0.0)    # (16, B*11)
    r3 = jnp.maximum(a3, shl(a3, 1))
    g = mm(r3, selh_ref[...])                                   # (16, P3*B)

    # ---- flatten ((l, c) row order; wf1 pre-reordered on host) + f1 + ReLU + f2
    rhs = jnp.concatenate(
        [g[:, l * batch:(l + 1) * batch] for l in range(P3)], axis=0)   # (64, B)
    f1 = jnp.maximum(mm(wf1_ref[...], rhs) + bf1_ref[...], 0.0)         # (32, B)
    out_ref[...] = mm(wf2_ref[...], f1) + bf2_ref[...]                  # (3, B)


# ------------------------------ host glue ----------------------------------
def _selection_matrices(batch):
    # pool1: picks stride-1 conv1 position t = s*150 + 6q  (q = pooled index)
    sel1 = np.zeros((batch * L_IN, batch * P1), np.float32)
    # pool2: picks position s*24 + 2p
    sel2 = np.zeros((batch * P1, batch * P2), np.float32)
    # pool3 + head gather: picks position s*11 + 2p into column p*B + s
    selh = np.zeros((batch * P2, P3 * batch), np.float32)
    for s in range(batch):
        for q in range(P1):
            sel1[s * L_IN + 6 * q, s * P1 + q] = 1.0
        for p in range(P2):
            sel2[s * P1 + 2 * p, s * P2 + p] = 1.0
        for p in range(P3):
            selh[s * P2 + 2 * p, p * batch + s] = 1.0
    return jnp.asarray(sel1), jnp.asarray(sel2), jnp.asarray(selh)


def pack_params(params, batch):
    """One-time parameter packing (kept OUT of the per-call jitted path)."""
    w1, b1, w2, b2, w3, b3, wf1, bf1, wf2, bf2 = params
    w1k = jnp.transpose(w1, (2, 0, 1))                            # (5, 32, 22) per tap
    w2p = jnp.transpose(w2, (0, 2, 1)).reshape(16, 32 * 3)        # col = k*32 + c
    w3p = jnp.transpose(w3, (0, 2, 1)).reshape(16, 16 * 3)        # col = k*16 + c
    # reorder f1 columns from (c*4 + l) to (l*16 + c) to match the in-kernel rhs
    wf1p = wf1.reshape(32, 16, P3).transpose(0, 2, 1).reshape(32, 16 * P3)
    sel1, sel2, selh = _selection_matrices(batch)
    return (w1k, b1.reshape(-1, 1), w2p, b2.reshape(-1, 1),
            w3p, b3.reshape(-1, 1), wf1p, bf1.reshape(-1, 1),
            wf2, bf2.reshape(-1, 1), sel1, sel2, selh)


def _net1_forward_impl(x, packed):
    (w1k, b1c, w2p, b2c, w3p, b3c, wf1p, bf1c, wf2, bf2c,
     sel1, sel2, selh) = packed
    batch = x.shape[0]
    out = pl.pallas_call(
        net1_kernel,
        out_shape=jax.ShapeDtypeStruct((3, batch), jnp.float32),
    )(x, w1k, b1c, w2p, b2c, w3p, b3c, wf1p, bf1c, wf2, bf2c,
      sel1, sel2, selh)
    return out.T                                                  # (B, 3)


net1_forward = jax.jit(_net1_forward_impl)


# ----------------------- independent numpy reference -----------------------
def np_conv1d(x, w, b, stride):
    Bn, Cin, L = x.shape
    Cout, _, K = w.shape
    Lout = (L - K) // stride + 1
    cols = np.stack([x[:, :, i * stride:i * stride + K] for i in range(Lout)],
                    axis=2)                                  # (B, Cin, Lout, K)
    return np.einsum('bclk,ock->bol', cols, w) + b[None, :, None]


def np_maxpool(x, k):
    Bn, C, L = x.shape
    P = L // k
    return x[:, :, :P * k].reshape(Bn, C, P, k).max(-1)


def np_reference(x, params):
    (w1, b1, w2, b2, w3, b3, wf1, bf1, wf2, bf2) = [np.array(p) for p in params]
    h = np_maxpool(np.maximum(np_conv1d(x, w1, b1, 2), 0.0), 3)
    h = np_maxpool(np.maximum(np_conv1d(h, w2, b2, 1), 0.0), 2)
    h = np_maxpool(np.maximum(np_conv1d(h, w3, b3, 1), 0.0), 2)
    h = h.reshape(h.shape[0], -1)
    h = np.maximum(h @ wf1.T + bf1, 0.0)
    return h @ wf2.T + bf2


# --------------------------------- main ------------------------------------
def _uniform(key, shape, fan_in):
    bound = 1.0 / np.sqrt(fan_in)
    return jax.random.uniform(key, shape, jnp.float32, -bound, bound)


if __name__ == "__main__":
    key = jax.random.PRNGKey(0)
    ks = jax.random.split(key, 11)

    params = (
        _uniform(ks[0], (32, 22, 5), 22 * 5),   # conv1 w
        _uniform(ks[1], (32,),       22 * 5),   # conv1 b
        _uniform(ks[2], (16, 32, 3), 32 * 3),   # conv2 w
        _uniform(ks[3], (16,),       32 * 3),   # conv2 b
        _uniform(ks[4], (16, 16, 3), 16 * 3),   # conv3 w
        _uniform(ks[5], (16,),       16 * 3),   # conv3 b
        _uniform(ks[6], (32, 64),    64),       # f1 w
        _uniform(ks[7], (32,),       64),       # f1 b
        _uniform(ks[8], (3, 32),     32),       # f2 w
        _uniform(ks[9], (3,),        32),       # f2 b
    )

    x = jax.random.normal(ks[10], (B, C_IN, L_IN), jnp.float32)

    packed = pack_params(params, B)            # one-time packing, outside jit
    out = net1_forward(x, packed)
    out = jax.block_until_ready(out)

    ref = np_reference(np.array(x), params)
    assert out.shape == (B, 3), out.shape
    assert np.allclose(np.array(out), ref, rtol=1e-4, atol=1e-4), \
        f"max abs err {np.max(np.abs(np.array(out) - ref))}"

    print("KERNEL_OK")
</pallas_src>

<mosaic_0001>
module attributes {stable_mosaic.version = 11 : i64} {
  func.func @net1_kernel(%arg0: memref<2x22x150xf32, #tpu.memory_space<vmem>>, %arg1: memref<5x32x22xf32, #tpu.memory_space<vmem>>, %arg2: memref<32x1xf32, #tpu.memory_space<vmem>>, %arg3: memref<16x96xf32, #tpu.memory_space<vmem>>, %arg4: memref<16x1xf32, #tpu.memory_space<vmem>>, %arg5: memref<16x48xf32, #tpu.memory_space<vmem>>, %arg6: memref<16x1xf32, #tpu.memory_space<vmem>>, %arg7: memref<32x64xf32, #tpu.memory_space<vmem>>, %arg8: memref<32x1xf32, #tpu.memory_space<vmem>>, %arg9: memref<3x32xf32, #tpu.memory_space<vmem>>, %arg10: memref<3x1xf32, #tpu.memory_space<vmem>>, %arg11: memref<300x48xf32, #tpu.memory_space<vmem>>, %arg12: memref<48x22xf32, #tpu.memory_space<vmem>>, %arg13: memref<22x8xf32, #tpu.memory_space<vmem>>, %arg14: memref<3x2xf32, #tpu.memory_space<vmem>>) attributes {dimension_semantics = [], scalar_prefetch = 0 : i64, scratch_operands = 0 : i64, tpu.core_type = #tpu.core_type<tc>} {
    %c0 = arith.constant 0 : index
    %c0_0 = arith.constant 0 : index
    %c0_1 = arith.constant 0 : index
    %0 = vector.load %arg0[%c0, %c0_0, %c0_1] : memref<2x22x150xf32, #tpu.memory_space<vmem>>, vector<1x22x150xf32>
    %1 = vector.shape_cast %0 : vector<1x22x150xf32> to vector<22x150xf32>
    %c1 = arith.constant 1 : index
    %c0_2 = arith.constant 0 : index
    %c0_3 = arith.constant 0 : index
    %2 = vector.load %arg0[%c1, %c0_2, %c0_3] : memref<2x22x150xf32, #tpu.memory_space<vmem>>, vector<1x22x150xf32>
    %3 = vector.shape_cast %2 : vector<1x22x150xf32> to vector<22x150xf32>
    %4 = tpu.concatenate %1, %3 in 1 : vector<22x150xf32>, vector<22x150xf32> -> vector<22x300xf32>
    %c0_4 = arith.constant 0 : index
    %c0_5 = arith.constant 0 : index
    %5 = vector.load %arg2[%c0_4, %c0_5] : memref<32x1xf32, #tpu.memory_space<vmem>>, vector<32x1xf32>
    %c0_6 = arith.constant 0 : index
    %c0_7 = arith.constant 0 : index
    %c0_8 = arith.constant 0 : index
    %6 = vector.load %arg1[%c0_6, %c0_7, %c0_8] : memref<5x32x22xf32, #tpu.memory_space<vmem>>, vector<1x32x22xf32>
    %7 = vector.shape_cast %6 : vector<1x32x22xf32> to vector<32x22xf32>
    %cst = arith.constant dense<0.000000e+00> : vector<32x300xf32>
    %8 = tpu.matmul %7, %4, %cst {dimension_numbers = #tpu.dot_dimension_numbers<[1], [0], [0], [1], [0, 0, 1, 1], [], []>} : vector<32x22xf32>, vector<22x300xf32>, vector<32x300xf32> -> vector<32x300xf32>
    %9 = vector.broadcast %5 : vector<32x1xf32> to vector<32x300xf32>
    %10 = arith.addf %9, %8 : vector<32x300xf32>
    %c1_9 = arith.constant 1 : index
    %c0_10 = arith.constant 0 : index
    %c0_11 = arith.constant 0 : index
    %11 = vector.load %arg1[%c1_9, %c0_10, %c0_11] : memref<5x32x22xf32, #tpu.memory_space<vmem>>, vector<1x32x22xf32>
    %12 = vector.shape_cast %11 : vector<1x32x22xf32> to vector<32x22xf32>
    %13 = vector.extract_strided_slice %4 {offsets = [0, 1], sizes = [22, 299], strides = [1, 1]} : vector<22x300xf32> to vector<22x299xf32>
    %14 = vector.extract_strided_slice %4 {offsets = [0, 0], sizes = [22, 1], strides = [1, 1]} : vector<22x300xf32> to vector<22x1xf32>
    %15 = tpu.concatenate %13, %14 in 1 : vector<22x299xf32>, vector<22x1xf32> -> vector<22x300xf32>
    %cst_12 = arith.constant dense<0.000000e+00> : vector<32x300xf32>
    %16 = tpu.matmul %12, %15, %cst_12 {dimension_numbers = #tpu.dot_dimension_numbers<[1], [0], [0], [1], [0, 0, 1, 1], [], []>} : vector<32x22xf32>, vector<22x300xf32>, vector<32x300xf32> -> vector<32x300xf32>
    %17 = arith.addf %10, %16 : vector<32x300xf32>
    %c2 = arith.constant 2 : index
    %c0_13 = arith.constant 0 : index
    %c0_14 = arith.constant 0 : index
    %18 = vector.load %arg1[%c2, %c0_13, %c0_14] : memref<5x32x22xf32, #tpu.memory_space<vmem>>, vector<1x32x22xf32>
    %19 = vector.shape_cast %18 : vector<1x32x22xf32> to vector<32x22xf32>
    %20 = vector.extract_strided_slice %4 {offsets = [0, 2], sizes = [22, 298], strides = [1, 1]} : vector<22x300xf32> to vector<22x298xf32>
    %21 = vector.extract_strided_slice %4 {offsets = [0, 0], sizes = [22, 2], strides = [1, 1]} : vector<22x300xf32> to vector<22x2xf32>
    %22 = tpu.concatenate %20, %21 in 1 : vector<22x298xf32>, vector<22x2xf32> -> vector<22x300xf32>
    %cst_15 = arith.constant dense<0.000000e+00> : vector<32x300xf32>
    %23 = tpu.matmul %19, %22, %cst_15 {dimension_numbers = #tpu.dot_dimension_numbers<[1], [0], [0], [1], [0, 0, 1, 1], [], []>} : vector<32x22xf32>, vector<22x300xf32>, vector<32x300xf32> -> vector<32x300xf32>
    %24 = arith.addf %17, %23 : vector<32x300xf32>
    %c3 = arith.constant 3 : index
    %c0_16 = arith.constant 0 : index
    %c0_17 = arith.constant 0 : index
    %25 = vector.load %arg1[%c3, %c0_16, %c0_17] : memref<5x32x22xf32, #tpu.memory_space<vmem>>, vector<1x32x22xf32>
    %26 = vector.shape_cast %25 : vector<1x32x22xf32> to vector<32x22xf32>
    %27 = vector.extract_strided_slice %4 {offsets = [0, 3], sizes = [22, 297], strides = [1, 1]} : vector<22x300xf32> to vector<22x297xf32>
    %28 = vector.extract_strided_slice %4 {offsets = [0, 0], sizes = [22, 3], strides = [1, 1]} : vector<22x300xf32> to vector<22x3xf32>
    %29 = tpu.concatenate %27, %28 in 1 : vector<22x297xf32>, vector<22x3xf32> -> vector<22x300xf32>
    %cst_18 = arith.constant dense<0.000000e+00> : vector<32x300xf32>
    %30 = tpu.matmul %26, %29, %cst_18 {dimension_numbers = #tpu.dot_dimension_numbers<[1], [0], [0], [1], [0, 0, 1, 1], [], []>} : vector<32x22xf32>, vector<22x300xf32>, vector<32x300xf32> -> vector<32x300xf32>
    %31 = arith.addf %24, %30 : vector<32x300xf32>
    %c4 = arith.constant 4 : index
    %c0_19 = arith.constant 0 : index
    %c0_20 = arith.constant 0 : index
    %32 = vector.load %arg1[%c4, %c0_19, %c0_20] : memref<5x32x22xf32, #tpu.memory_space<vmem>>, vector<1x32x22xf32>
    %33 = vector.shape_cast %32 : vector<1x32x22xf32> to vector<32x22xf32>
    %34 = vector.extract_strided_slice %4 {offsets = [0, 4], sizes = [22, 296], strides = [1, 1]} : vector<22x300xf32> to vector<22x296xf32>
    %35 = vector.extract_strided_slice %4 {offsets = [0, 0], sizes = [22, 4], strides = [1, 1]} : vector<22x300xf32> to vector<22x4xf32>
    %36 = tpu.concatenate %34, %35 in 1 : vector<22x296xf32>, vector<22x4xf32> -> vector<22x300xf32>
    %cst_21 = arith.constant dense<0.000000e+00> : vector<32x300xf32>
    %37 = tpu.matmul %33, %36, %cst_21 {dimension_numbers = #tpu.dot_dimension_numbers<[1], [0], [0], [1], [0, 0, 1, 1], [], []>} : vector<32x22xf32>, vector<22x300xf32>, vector<32x300xf32> -> vector<32x300xf32>
    %38 = arith.addf %31, %37 : vector<32x300xf32>
    %cst_22 = arith.constant 0.000000e+00 : f32
    %39 = vector.broadcast %cst_22 : f32 to vector<32x300xf32>
    %40 = arith.maximumf %38, %39 : vector<32x300xf32>
    %41 = vector.extract_strided_slice %40 {offsets = [0, 2], sizes = [32, 298], strides = [1, 1]} : vector<32x300xf32> to vector<32x298xf32>
    %42 = vector.extract_strided_slice %40 {offsets = [0, 0], sizes = [32, 2], strides = [1, 1]} : vector<32x300xf32> to vector<32x2xf32>
    %43 = tpu.concatenate %41, %42 in 1 : vector<32x298xf32>, vector<32x2xf32> -> vector<32x300xf32>
    %44 = vector.extract_strided_slice %40 {offsets = [0, 4], sizes = [32, 296], strides = [1, 1]} : vector<32x300xf32> to vector<32x296xf32>
    %45 = vector.extract_strided_slice %40 {offsets = [0, 0], sizes = [32, 4], strides = [1, 1]} : vector<32x300xf32> to vector<32x4xf32>
    %46 = tpu.concatenate %44, %45 in 1 : vector<32x296xf32>, vector<32x4xf32> -> vector<32x300xf32>
    %47 = arith.maximumf %43, %46 : vector<32x300xf32>
    %48 = arith.maximumf %40, %47 : vector<32x300xf32>
    %c0_23 = arith.constant 0 : index
    %c0_24 = arith.constant 0 : index
    %49 = vector.load %arg11[%c0_23, %c0_24] : memref<300x48xf32, #tpu.memory_space<vmem>>, vector<300x48xf32>
    %cst_25 = arith.constant dense<0.000000e+00> : vector<32x48xf32>
    %50 = tpu.matmul %48, %49, %cst_25 {dimension_numbers = #tpu.dot_dimension_numbers<[1], [0], [0], [1], [0, 0, 1, 1], [], []>} : vector<32x300xf32>, vector<300x48xf32>, vector<32x48xf32> -> vector<32x48xf32>
    %51 = vector.extract_strided_slice %50 {offsets = [0, 1], sizes = [32, 47], strides = [1, 1]} : vector<32x48xf32> to vector<32x47xf32>
    %52 = vector.extract_strided_slice %50 {offsets = [0, 0], sizes = [32, 1], strides = [1, 1]} : vector<32x48xf32> to vector<32x1xf32>
    %53 = tpu.concatenate %51, %52 in 1 : vector<32x47xf32>, vector<32x1xf32> -> vector<32x48xf32>
    %54 = vector.extract_strided_slice %50 {offsets = [0, 2], sizes = [32, 46], strides = [1, 1]} : vector<32x48xf32> to vector<32x46xf32>
    %55 = vector.extract_strided_slice %50 {offsets = [0, 0], sizes = [32, 2], strides = [1, 1]} : vector<32x48xf32> to vector<32x2xf32>
    %56 = tpu.concatenate %54, %55 in 1 : vector<32x46xf32>, vector<32x2xf32> -> vector<32x48xf32>
    %57 = tpu.concatenate %50, %53, %56 in 0 : vector<32x48xf32>, vector<32x48xf32>, vector<32x48xf32> -> vector<96x48xf32>
    %c0_26 = arith.constant 0 : index
    %c0_27 = arith.constant 0 : index
    %58 = vector.load %arg3[%c0_26, %c0_27] : memref<16x96xf32, #tpu.memory_space<vmem>>, vector<16x96xf32>
    %cst_28 = arith.constant dense<0.000000e+00> : vector<16x48xf32>
    %59 = tpu.matmul %58, %57, %cst_28 {dimension_numbers = #tpu.dot_dimension_numbers<[1], [0], [0], [1], [0, 0, 1, 1], [], []>} : vector<16x96xf32>, vector<96x48xf32>, vector<16x48xf32> -> vector<16x48xf32>
    %c0_29 = arith.constant 0 : index
    %c0_30 = arith.constant 0 : index
    %60 = vector.load %arg4[%c0_29, %c0_30] : memref<16x1xf32, #tpu.memory_space<vmem>>, vector<16x1xf32>
    %61 = vector.broadcast %60 : vector<16x1xf32> to vector<16x48xf32>
    %62 = arith.addf %59, %61 : vector<16x48xf32>
    %cst_31 = arith.constant 0.000000e+00 : f32
    %63 = vector.broadcast %cst_31 : f32 to vector<16x48xf32>
    %64 = arith.maximumf %62, %63 : vector<16x48xf32>
    %65 = vector.extract_strided_slice %64 {offsets = [0, 1], sizes = [16, 47], strides = [1, 1]} : vector<16x48xf32> to vector<16x47xf32>
    %66 = vector.extract_strided_slice %64 {offsets = [0, 0], sizes = [16, 1], strides = [1, 1]} : vector<16x48xf32> to vector<16x1xf32>
    %67 = tpu.concatenate %65, %66 in 1 : vector<16x47xf32>, vector<16x1xf32> -> vector<16x48xf32>
    %68 = arith.maximumf %64, %67 : vector<16x48xf32>
    %c0_32 = arith.constant 0 : index
    %c0_33 = arith.constant 0 : index
    %69 = vector.load %arg12[%c0_32, %c0_33] : memref<48x22xf32, #tpu.memory_space<vmem>>, vector<48x22xf32>
    %cst_34 = arith.constant dense<0.000000e+00> : vector<16x22xf32>
    %70 = tpu.matmul %68, %69, %cst_34 {dimension_numbers = #tpu.dot_dimension_numbers<[1], [0], [0], [1], [0, 0, 1, 1], [], []>} : vector<16x48xf32>, vector<48x22xf32>, vector<16x22xf32> -> vector<16x22xf32>
    %71 = vector.extract_strided_slice %70 {offsets = [0, 1], sizes = [16, 21], strides = [1, 1]} : vector<16x22xf32> to vector<16x21xf32>
    %72 = vector.extract_strided_slice %70 {offsets = [0, 0], sizes = [16, 1], strides = [1, 1]} : vector<16x22xf32> to vector<16x1xf32>
    %73 = tpu.concatenate %71, %72 in 1 : vector<16x21xf32>, vector<16x1xf32> -> vector<16x22xf32>
    %74 = vector.extract_strided_slice %70 {offsets = [0, 2], sizes = [16, 20], strides = [1, 1]} : vector<16x22xf32> to vector<16x20xf32>
    %75 = vector.extract_strided_slice %70 {offsets = [0, 0], sizes = [16, 2], strides = [1, 1]} : vector<16x22xf32> to vector<16x2xf32>
    %76 = tpu.concatenate %74, %75 in 1 : vector<16x20xf32>, vector<16x2xf32> -> vector<16x22xf32>
    %77 = tpu.concatenate %70, %73, %76 in 0 : vector<16x22xf32>, vector<16x22xf32>, vector<16x22xf32> -> vector<48x22xf32>
    %c0_35 = arith.constant 0 : index
    %c0_36 = arith.constant 0 : index
    %78 = vector.load %arg5[%c0_35, %c0_36] : memref<16x48xf32, #tpu.memory_space<vmem>>, vector<16x48xf32>
    %cst_37 = arith.constant dense<0.000000e+00> : vector<16x22xf32>
    %79 = tpu.matmul %78, %77, %cst_37 {dimension_numbers = #tpu.dot_dimension_numbers<[1], [0], [0], [1], [0, 0, 1, 1], [], []>} : vector<16x48xf32>, vector<48x22xf32>, vector<16x22xf32> -> vector<16x22xf32>
    %c0_38 = arith.constant 0 : index
    %c0_39 = arith.constant 0 : index
    %80 = vector.load %arg6[%c0_38, %c0_39] : memref<16x1xf32, #tpu.memory_space<vmem>>, vector<16x1xf32>
    %81 = vector.broadcast %80 : vector<16x1xf32> to vector<16x22xf32>
    %82 = arith.addf %79, %81 : vector<16x22xf32>
    %cst_40 = arith.constant 0.000000e+00 : f32
    %83 = vector.broadcast %cst_40 : f32 to vector<16x22xf32>
    %84 = arith.maximumf %82, %83 : vector<16x22xf32>
    %85 = vector.extract_strided_slice %84 {offsets = [0, 1], sizes = [16, 21], strides = [1, 1]} : vector<16x22xf32> to vector<16x21xf32>
    %86 = vector.extract_strided_slice %84 {offsets = [0, 0], sizes = [16, 1], strides = [1, 1]} : vector<16x22xf32> to vector<16x1xf32>
    %87 = tpu.concatenate %85, %86 in 1 : vector<16x21xf32>, vector<16x1xf32> -> vector<16x22xf32>
    %88 = arith.maximumf %84, %87 : vector<16x22xf32>
    %c0_41 = arith.constant 0 : index
    %c0_42 = arith.constant 0 : index
    %89 = vector.load %arg13[%c0_41, %c0_42] : memref<22x8xf32, #tpu.memory_space<vmem>>, vector<22x8xf32>
    %cst_43 = arith.constant dense<0.000000e+00> : vector<16x8xf32>
    %90 = tpu.matmul %88, %89, %cst_43 {dimension_numbers = #tpu.dot_dimension_numbers<[1], [0], [0], [1], [0, 0, 1, 1], [], []>} : vector<16x22xf32>, vector<22x8xf32>, vector<16x8xf32> -> vector<16x8xf32>
    %91 = vector.extract_strided_slice %90 {offsets = [0, 0], sizes = [16, 2], strides = [1, 1]} : vector<16x8xf32> to vector<16x2xf32>
    %92 = vector.extract_strided_slice %90 {offsets = [0, 2], sizes = [16, 2], strides = [1, 1]} : vector<16x8xf32> to vector<16x2xf32>
    %93 = vector.extract_strided_slice %90 {offsets = [0, 4], sizes = [16, 2], strides = [1, 1]} : vector<16x8xf32> to vector<16x2xf32>
    %94 = vector.extract_strided_slice %90 {offsets = [0, 6], sizes = [16, 2], strides = [1, 1]} : vector<16x8xf32> to vector<16x2xf32>
    %95 = tpu.concatenate %91, %92, %93, %94 in 0 : vector<16x2xf32>, vector<16x2xf32>, vector<16x2xf32>, vector<16x2xf32> -> vector<64x2xf32>
    %c0_44 = arith.constant 0 : index
    %c0_45 = arith.constant 0 : index
    %96 = vector.load %arg7[%c0_44, %c0_45] : memref<32x64xf32, #tpu.memory_space<vmem>>, vector<32x64xf32>
    %cst_46 = arith.constant dense<0.000000e+00> : vector<32x2xf32>
    %97 = tpu.matmul %96, %95, %cst_46 {dimension_numbers = #tpu.dot_dimension_numbers<[1], [0], [0], [1], [0, 0, 1, 1], [], []>} : vector<32x64xf32>, vector<64x2xf32>, vector<32x2xf32> -> vector<32x2xf32>
    %c0_47 = arith.constant 0 : index
    %c0_48 = arith.constant 0 : index
    %98 = vector.load %arg8[%c0_47, %c0_48] : memref<32x1xf32, #tpu.memory_space<vmem>>, vector<32x1xf32>
    %99 = vector.broadcast %98 : vector<32x1xf32> to vector<32x2xf32>
    %100 = arith.addf %97, %99 : vector<32x2xf32>
    %cst_49 = arith.constant 0.000000e+00 : f32
    %101 = vector.broadcast %cst_49 : f32 to vector<32x2xf32>
    %102 = arith.maximumf %100, %101 : vector<32x2xf32>
    %c0_50 = arith.constant 0 : index
    %c0_51 = arith.constant 0 : index
    %103 = vector.load %arg9[%c0_50, %c0_51] : memref<3x32xf32, #tpu.memory_space<vmem>>, vector<3x32xf32>
    %cst_52 = arith.constant dense<0.000000e+00> : vector<3x2xf32>
    %104 = tpu.matmul %103, %102, %cst_52 {dimension_numbers = #tpu.dot_dimension_numbers<[1], [0], [0], [1], [0, 0, 1, 1], [], []>} : vector<3x32xf32>, vector<32x2xf32>, vector<3x2xf32> -> vector<3x2xf32>
    %c0_53 = arith.constant 0 : index
    %c0_54 = arith.constant 0 : index
    %105 = vector.load %arg10[%c0_53, %c0_54] : memref<3x1xf32, #tpu.memory_space<vmem>>, vector<3x1xf32>
    %106 = vector.broadcast %105 : vector<3x1xf32> to vector<3x2xf32>
    %107 = arith.addf %104, %106 : vector<3x2xf32>
    %c0_55 = arith.constant 0 : index
    %c0_56 = arith.constant 0 : index
    %108 = vector.load %arg14[%c0_55, %c0_56] : memref<3x2xf32, #tpu.memory_space<vmem>>, vector<3x2xf32>
    tpu.vector_store %arg14[%c0_55, %c0_56], %107 {strides = array<i32>} : memref<3x2xf32, #tpu.memory_space<vmem>>, vector<3x2xf32>,
    return
  }
}

</mosaic_0001>

<llo_original>
// kernel: _net1_forward_impl.1
$region0: #{_net1_forward_impl.1}
  #allocation0 [shape = 'u32[]', space=smem, size = 0x4, offset = 0x4, fixed_abs, tag = 'smem constant byte address 0x4 - core index']
  #allocation1 [shape = 'u32[144,128]{1,0:T(1,128)}', space=vmem, size = 0x12000, scoped, tag = 'internal scratch']
  %s0 = inlined_call_operand.vmem [shape: f32[2,22,150], index: 0, kind: input, shape index: {}]
  %s1 = inlined_call_operand.vmem [shape: f32[5,32,22], index: 1, kind: input, shape index: {}]
  %s2 = inlined_call_operand.vmem [shape: f32[32,1], index: 2, kind: input, shape index: {}]
  %s3 = inlined_call_operand.vmem [shape: f32[16,96], index: 3, kind: input, shape index: {}]
  %s4 = inlined_call_operand.vmem [shape: f32[16,1], index: 4, kind: input, shape index: {}]
  %s5 = inlined_call_operand.vmem [shape: f32[16,48], index: 5, kind: input, shape index: {}]
  %s6 = inlined_call_operand.vmem [shape: f32[16,1], index: 6, kind: input, shape index: {}]
  %s7 = inlined_call_operand.vmem [shape: f32[32,64], index: 7, kind: input, shape index: {}]
  %s8 = inlined_call_operand.vmem [shape: f32[32,1], index: 8, kind: input, shape index: {}]
  %s9 = inlined_call_operand.vmem [shape: f32[3,32], index: 9, kind: input, shape index: {}]
  %s10 = inlined_call_operand.vmem [shape: f32[3,1], index: 10, kind: input, shape index: {}]
  %s11 = inlined_call_operand.vmem [shape: f32[300,48], index: 11, kind: input, shape index: {}]
  %s12 = inlined_call_operand.vmem [shape: f32[48,22], index: 12, kind: input, shape index: {}]
  %s13 = inlined_call_operand.vmem [shape: f32[22,8], index: 13, kind: input, shape index: {}]
  %s14 = inlined_call_operand.vmem [shape: f32[3,2], index: 14, kind: output, shape index: {}]
  %s15 = sld [smem:[#allocation0]]
  $region66: #{_net1_forward_impl.1} parent=0
    _
  %s17 = ssub.s32 1, %s15
  %s18 = scalar_select 0, %s17, %s15
  // Predicated region
  $region2: #{_net1_forward_impl.1} parent=0 // pred_check
    _
  $region3: #{_net1_forward_impl.1} parent=0 // pred_check_branch
    %20 = sbr.rel (0) target = $region5
  $region4: #{_net1_forward_impl.1} parent=0 // pred_region
    _
  $region5: #{_net1_forward_impl.1} parent=0 // pred_fallthru
    _
  // Predicated region
  $region6: #{_net1_forward_impl.1} parent=0 // pred_check
    _
  $region7: #{_net1_forward_impl.1} parent=0 // pred_check_branch
    %22 = sbr.rel (0) target = $region9
  $region8: #{_net1_forward_impl.1} parent=0 // pred_region
    _
  $region9: #{_net1_forward_impl.1} parent=0 // pred_fallthru
    _
  // Predicated region
  $region10: #{_net1_forward_impl.1} parent=0 // pred_check
    _
  $region11: #{_net1_forward_impl.1} parent=0 // pred_check_branch
    %24 = sbr.rel (0) target = $region13
  $region12: #{_net1_forward_impl.1} parent=0 // pred_region
    _
  $region13: #{_net1_forward_impl.1} parent=0 // pred_fallthru
    _
  // Predicated region
  $region14: #{_net1_forward_impl.1} parent=0 // pred_check
    _
  $region15: #{_net1_forward_impl.1} parent=0 // pred_check_branch
    %26 = sbr.rel (0) target = $region17
  $region16: #{_net1_forward_impl.1} parent=0 // pred_region
    _
  $region17: #{_net1_forward_impl.1} parent=0 // pred_fallthru
    _
  // Predicated region
  $region18: #{_net1_forward_impl.1} parent=0 // pred_check
    _
  $region19: #{_net1_forward_impl.1} parent=0 // pred_check_branch
    %28 = sbr.rel (0) target = $region21
  $region20: #{_net1_forward_impl.1} parent=0 // pred_region
    _
  $region21: #{_net1_forward_impl.1} parent=0 // pred_fallthru
    _
  // Predicated region
  $region22: #{_net1_forward_impl.1} parent=0 // pred_check
    _
  $region23: #{_net1_forward_impl.1} parent=0 // pred_check_branch
    %30 = sbr.rel (0) target = $region25
  $region24: #{_net1_forward_impl.1} parent=0 // pred_region
    _
  $region25: #{_net1_forward_impl.1} parent=0 // pred_fallthru
    _
  // Predicated region
  $region26: #{_net1_forward_impl.1} parent=0 // pred_check
    _
  $region27: #{_net1_forward_impl.1} parent=0 // pred_check_branch
    %32 = sbr.rel (0) target = $region29
  $region28: #{_net1_forward_impl.1} parent=0 // pred_region
    _
  $region29: #{_net1_forward_impl.1} parent=0 // pred_fallthru
    _
  // Predicated region
  $region30: #{_net1_forward_impl.1} parent=0 // pred_check
    _
  $region31: #{_net1_forward_impl.1} parent=0 // pred_check_branch
    %34 = sbr.rel (0) target = $region33
  $region32: #{_net1_forward_impl.1} parent=0 // pred_region
    _
  $region33: #{_net1_forward_impl.1} parent=0 // pred_fallthru
    _
  // Predicated region
  $region34: #{_net1_forward_impl.1} parent=0 // pred_check
    _
  $region35: #{_net1_forward_impl.1} parent=0 // pred_check_branch
    %36 = sbr.rel (0) target = $region37
  $region36: #{_net1_forward_impl.1} parent=0 // pred_region
    _
  $region37: #{_net1_forward_impl.1} parent=0 // pred_fallthru
    _
  // Predicated region
  $region38: #{_net1_forward_impl.1} parent=0 // pred_check
    _
  $region39: #{_net1_forward_impl.1} parent=0 // pred_check_branch
    %38 = sbr.rel (0) target = $region41
  $region40: #{_net1_forward_impl.1} parent=0 // pred_region
    _
  $region41: #{_net1_forward_impl.1} parent=0 // pred_fallthru
    _
  // Predicated region
  $region42: #{_net1_forward_impl.1} parent=0 // pred_check
    _
  $region43: #{_net1_forward_impl.1} parent=0 // pred_check_branch
    %40 = sbr.rel (0) target = $region45
  $region44: #{_net1_forward_impl.1} parent=0 // pred_region
    _
  $region45: #{_net1_forward_impl.1} parent=0 // pred_fallthru
    _
  // Predicated region
  $region46: #{_net1_forward_impl.1} parent=0 // pred_check
    _
  $region47: #{_net1_forward_impl.1} parent=0 // pred_check_branch
    %42 = sbr.rel (0) target = $region49
  $region48: #{_net1_forward_impl.1} parent=0 // pred_region
    _
  $region49: #{_net1_forward_impl.1} parent=0 // pred_fallthru
    _
  // Predicated region
  $region50: #{_net1_forward_impl.1} parent=0 // pred_check
    _
  $region51: #{_net1_forward_impl.1} parent=0 // pred_check_branch
    %44 = sbr.rel (0) target = $region53
  $region52: #{_net1_forward_impl.1} parent=0 // pred_region
    _
  $region53: #{_net1_forward_impl.1} parent=0 // pred_fallthru
    _
  // Predicated region
  $region54: #{_net1_forward_impl.1} parent=0 // pred_check
    _
  $region55: #{_net1_forward_impl.1} parent=0 // pred_check_branch
    %46 = sbr.rel (0) target = $region57
  $region56: #{_net1_forward_impl.1} parent=0 // pred_region
    _
  $region57: #{_net1_forward_impl.1} parent=0 // pred_fallthru
    _
  %v47 = vld [vmem:[%s0] sm:$0xff]
  %v48 = vld [vmem:[%s0 + $0x8] sm:$0xff]
  %v49 = vld [vmem:[%s0 + $0x10] sm:$0xff]
  %v50 = vld [vmem:[%s0 + $0x18] sm:$0xff]
  %v51 = vld [vmem:[%s0 + $0x20] sm:$0x3f]
  %v52 = vld [vmem:[%s0 + $0x28] sm:$0x3f]
  %s53 = scalar_lea.vmem %s0, 48
  %v54 = vld [vmem:[%s53] sm:$0xff]
  %v55 = vld [vmem:[%s53 + $0x8] sm:$0xff]
  %v56 = vld [vmem:[%s53 + $0x10] sm:$0xff]
  %v57 = vld [vmem:[%s53 + $0x18] sm:$0xff]
  %v58 = vld [vmem:[%s53 + $0x20] sm:$0x3f]
  %v59 = vld [vmem:[%s53 + $0x28] sm:$0x3f]
  %66 = vrot.lane.b32.xlu0 %v54, 22
  %v67 = vpop.permute.xlu0 %66
  %68 = vrot.lane.b32.xlu0 %v55, 22
  %v69 = vpop.permute.xlu0 %68
  %70 = vrot.lane.b32.xlu0 %v56, 22
  %v71 = vpop.permute.xlu0 %70
  %72 = vrot.lane.b32.xlu0 %v57, 22
  %v73 = vpop.permute.xlu0 %72
  %74 = vrot.lane.b32.xlu0 %v58, 22
  %v75 = vpop.permute.xlu0 %74
  %76 = vrot.lane.b32.xlu0 %v59, 22
  %v77 = vpop.permute.xlu0 %76
  %vm78 = vcmask 179200
  %v79 = vsel %vm78, %v67, %v69
  %v80 = vsel %vm78, %v71, %v73
  %v81 = vsel %vm78, %v75, %v77
  %v87 = vsel %vm78, %v48, %v67
  %v88 = vsel %vm78, %v50, %v71
  %v89 = vsel %vm78, %v52, %v75
  %v90 = vld [vmem:[%s2] sm:$0xff]
  %v91 = vld [vmem:[%s2 + $0x8] sm:$0xff]
  %v92 = vld [vmem:[%s2 + $0x10] sm:$0xff]
  %v93 = vld [vmem:[%s2 + $0x18] sm:$0xff]
  %v94 = vld [vmem:[%s1] sm:$0xff]
  %v95 = vld [vmem:[%s1 + $0x8] sm:$0xff]
  %v96 = vld [vmem:[%s1 + $0x10] sm:$0xff]
  %v97 = vld [vmem:[%s1 + $0x18] sm:$0xff]
  %v99 = vsel %vm78, %v94, 0
  %v102 = vsel %vm78, %v95, 0
  %v105 = vsel %vm78, %v96, 0
  %v108 = vsel %vm78, %v97, 0
  %vm110 = vcmask 1045504
  %v112 = vsel %vm110, %v51, 0
  %v115 = vsel %vm110, %v89, 0
  %v117 = vsel %vm110, %v81, 0
  %119 = vmatprep.subr.mxu0 %v87
  %120 = vmatpush1.msra.mxu0 %v47
  %121 = vmatprep.subr.mxu0 %v88
  %122 = vmatpush1.msra.mxu0 %v49
  %123 = vmatprep.subr.mxu0 %v115
  %124 = vmatpush1.msra.mxu0 %v112
  %125 = vmatprep.subr.mxu0 0.0
  %126 = vmatpush1.msra.mxu0 0.0
  %127 = vmatprep.subr.mxu0 0.0
  %128 = vmatpush1.msra.mxu0 0.0
  %129 = vmatprep.subr.mxu0 0.0
  %130 = vmatpush1.msra.mxu0 0.0
  %131 = vmatprep.subr.mxu0 0.0
  %132 = vmatpush1.msra.mxu0 0.0
  %133 = vmatprep.subr.mxu0 0.0
  %134 = vmatpush1.msra.mxu0 0.0
  %135 = vmatprep.subr.mxu0 0.0
  %136 = vmatpush1.msra.mxu0 0.0
  %137 = vmatprep.subr.mxu0 0.0
  %138 = vmatpush1.msra.mxu0 0.0
  %139 = vmatprep.subr.mxu0 0.0
  %140 = vmatpush1.msra.mxu0 0.0
  %141 = vmatprep.subr.mxu0 0.0
  %142 = vmatpush1.msra.mxu0 0.0
  %143 = vmatprep.subr.mxu0 0.0
  %144 = vmatpush1.msra.mxu0 0.0
  %145 = vmatprep.subr.mxu0 0.0
  %146 = vmatpush1.msra.mxu0 0.0
  %147 = vmatprep.subr.mxu0 0.0
  %148 = vmatpush1.msra.mxu0 0.0
  %149 = vmatprep.subr.mxu0 0.0
  %150 = vmatpush1.msra.mxu0 0.0
  %151 = vmatprep.subr.mxu0 0.0
  %152 = vmatpush1.msra.mxu0 0.0
  %153 = vmatprep.subr.mxu0 0.0
  %154 = vmatpush1.msra.mxu0 0.0
  %155 = vmatprep.subr.mxu0 0.0
  %156 = vmatpush1.msra.mxu0 0.0
  %157 = vmatprep.subr.mxu0 0.0
  %158 = vmatpush1.msra.mxu0 0.0
  %159 = vmatprep.subr.mxu0 0.0
  %160 = vmatpush1.msra.mxu0 0.0
  %161 = vmatprep.subr.mxu0 0.0
  %162 = vmatpush1.msra.mxu0 0.0
  %163 = vmatprep.subr.mxu0 0.0
  %164 = vmatpush1.msra.mxu0 0.0
  %165 = vmatprep.subr.mxu0 0.0
  %166 = vmatpush1.msra.mxu0 0.0
  %167 = vmatprep.subr.mxu0 0.0
  %168 = vmatpush1.msra.mxu0 0.0
  %169 = vmatprep.subr.mxu0 0.0
  %170 = vmatpush1.msra.mxu0 0.0
  %171 = vmatprep.subr.mxu0 0.0
  %172 = vmatpush1.msra.mxu0 0.0
  %173 = vmatprep.subr.mxu0 0.0
  %174 = vmatpush1.msra.mxu0 0.0
  %175 = vmatprep.subr.mxu0 0.0
  %176 = vmatpush1.msra.mxu0 0.0
  %177 = vmatprep.subr.mxu0 0.0
  %178 = vmatpush1.msra.mxu0 0.0
  %179 = vmatprep.subr.mxu0 0.0
  %180 = vmatpush1.msra.mxu0 0.0
  %181 = vmatprep.subr.mxu0 0.0
  %182 = vmatpush1.msra.mxu0 0.0
  %183 = vmatprep.mubr.f32.mxu0 0.0
  %184 = vmatmul.mubr.f32.gmra.mrb[0].mxu0 %v99
  %v185 = vpop.f32.mrb[0].mxu0
  %v186 = vadd.f32 0.0, %v185
  %v187 = vpop.f32.mrb[0].mxu0
  %v188 = vadd.f32 0.0, %v187
  %189 = vmatprep.mubr.f32.mxu0 0.0
  %190 = vmatmul.mubr.f32.gmra.mrb[0].mxu0 %v102
  %v191 = vpop.f32.mrb[0].mxu0
  %v192 = vadd.f32 0.0, %v191
  %v193 = vpop.f32.mrb[0].mxu0
  %v194 = vadd.f32 0.0, %v193
  %195 = vmatprep.mubr.f32.mxu0 0.0
  %196 = vmatmul.mubr.f32.gmra.mrb[0].mxu0 %v105
  %v197 = vpop.f32.mrb[0].mxu0
  %v198 = vadd.f32 0.0, %v197
  %v199 = vpop.f32.mrb[0].mxu0
  %v200 = vadd.f32 0.0, %v199
  %201 = vmatprep.mubr.f32.mxu0 0.0
  %202 = vmatmul.mubr.f32.gmra.mrb[0].mxu0 %v108
  %v203 = vpop.f32.mrb[0].mxu0
  %v204 = vadd.f32 0.0, %v203
  %v205 = vpop.f32.mrb[0].mxu0
  %v206 = vadd.f32 0.0, %v205
  %207 = vdwg.mxu0
  %208 = vmatprep.subr.mxu0 0.0
  %209 = vmatpush1.msra.mxu0 %v79
  %210 = vmatprep.subr.mxu0 0.0
  %211 = vmatpush1.msra.mxu0 %v80
  %212 = vmatprep.subr.mxu0 0.0
  %213 = vmatpush1.msra.mxu0 %v117
  %214 = vmatprep.subr.mxu0 0.0
  %215 = vmatpush1.msra.mxu0 0.0
  %216 = vmatprep.subr.mxu0 0.0
  %217 = vmatpush1.msra.mxu0 0.0
  %218 = vmatprep.subr.mxu0 0.0
  %219 = vmatpush1.msra.mxu0 0.0
  %220 = vmatprep.subr.mxu0 0.0
  %221 = vmatpush1.msra.mxu0 0.0
  %222 = vmatprep.subr.mxu0 0.0
  %223 = vmatpush1.msra.mxu0 0.0
  %224 = vmatprep.subr.mxu0 0.0
  %225 = vmatpush1.msra.mxu0 0.0
  %226 = vmatprep.subr.mxu0 0.0
  %227 = vmatpush1.msra.mxu0 0.0
  %228 = vmatprep.subr.mxu0 0.0
  %229 = vmatpush1.msra.mxu0 0.0
  %230 = vmatprep.subr.mxu0 0.0
  %231 = vmatpush1.msra.mxu0 0.0
  %232 = vmatprep.subr.mxu0 0.0
  %233 = vmatpush1.msra.mxu0 0.0
  %234 = vmatprep.subr.mxu0 0.0
  %235 = vmatpush1.msra.mxu0 0.0
  %236 = vmatprep.subr.mxu0 0.0
  %237 = vmatpush1.msra.mxu0 0.0
  %238 = vmatprep.subr.mxu0 0.0
  %239 = vmatpush1.msra.mxu0 0.0
  %240 = vmatprep.subr.mxu0 0.0
  %241 = vmatpush1.msra.mxu0 0.0
  %242 = vmatprep.subr.mxu0 0.0
  %243 = vmatpush1.msra.mxu0 0.0
  %244 = vmatprep.subr.mxu0 0.0
  %245 = vmatpush1.msra.mxu0 0.0
  %246 = vmatprep.subr.mxu0 0.0
  %247 = vmatpush1.msra.mxu0 0.0
  %248 = vmatprep.subr.mxu0 0.0
  %249 = vmatpush1.msra.mxu0 0.0
  %250 = vmatprep.subr.mxu0 0.0
  %251 = vmatpush1.msra.mxu0 0.0
  %252 = vmatprep.subr.mxu0 0.0
  %253 = vmatpush1.msra.mxu0 0.0
  %254 = vmatprep.subr.mxu0 0.0
  %255 = vmatpush1.msra.mxu0 0.0
  %256 = vmatprep.subr.mxu0 0.0
  %257 = vmatpush1.msra.mxu0 0.0
  %258 = vmatprep.subr.mxu0 0.0
  %259 = vmatpush1.msra.mxu0 0.0
  %260 = vmatprep.subr.mxu0 0.0
  %261 = vmatpush1.msra.mxu0 0.0
  %262 = vmatprep.subr.mxu0 0.0
  %263 = vmatpush1.msra.mxu0 0.0
  %264 = vmatprep.subr.mxu0 0.0
  %265 = vmatpush1.msra.mxu0 0.0
  %266 = vmatprep.subr.mxu0 0.0
  %267 = vmatpush1.msra.mxu0 0.0
  %268 = vmatprep.subr.mxu0 0.0
  %269 = vmatpush1.msra.mxu0 0.0
  %270 = vmatprep.subr.mxu0 0.0
  %271 = vmatpush1.msra.mxu0 0.0
  %272 = vmatprep.mubr.f32.mxu0 0.0
  %273 = vmatmul.mubr.f32.gmra.mrb[0].mxu0 %v99
  %v274 = vpop.f32.mrb[0].mxu0
  %v275 = vadd.f32 0.0, %v274
  %v276 = vpop.f32.mrb[0].mxu0
  %277 = vmatprep.mubr.f32.mxu0 0.0
  %278 = vmatmul.mubr.f32.gmra.mrb[0].mxu0 %v102
  %v279 = vpop.f32.mrb[0].mxu0
  %v280 = vadd.f32 0.0, %v279
  %v281 = vpop.f32.mrb[0].mxu0
  %282 = vmatprep.mubr.f32.mxu0 0.0
  %283 = vmatmul.mubr.f32.gmra.mrb[0].mxu0 %v105
  %v284 = vpop.f32.mrb[0].mxu0
  %v285 = vadd.f32 0.0, %v284
  %v286 = vpop.f32.mrb[0].mxu0
  %287 = vmatprep.mubr.f32.mxu0 0.0
  %288 = vmatmul.mubr.f32.gmra.mrb[0].mxu0 %v108
  %v289 = vpop.f32.mrb[0].mxu0
  %v290 = vadd.f32 0.0, %v289
  %v291 = vpop.f32.mrb[0].mxu0
  %292 = vdwg.mxu0
  %294 = vset.pattern.permute.xlu0 0
  %295 = vperm.xlu0 %294, %v90
  %v296 = vpop.permute.xlu0 %295
  %299 = vset.pattern.permute.xlu0 0
  %300 = vperm.xlu0 %299, %v91
  %v301 = vpop.permute.xlu0 %300
  %304 = vset.pattern.permute.xlu0 0
  %305 = vperm.xlu0 %304, %v92
  %v306 = vpop.permute.xlu0 %305
  %309 = vset.pattern.permute.xlu0 0
  %310 = vperm.xlu0 %309, %v93
  %v311 = vpop.permute.xlu0 %310
  %v313 = vadd.f32 %v296, %v186
  %v314 = vadd.f32 %v296, %v188
  %v315 = vadd.f32 %v296, %v275
  %v316 = vadd.f32 %v301, %v192
  %v317 = vadd.f32 %v301, %v194
  %v318 = vadd.f32 %v301, %v280
  %v319 = vadd.f32 %v306, %v198
  %v320 = vadd.f32 %v306, %v200
  %v321 = vadd.f32 %v306, %v285
  %v322 = vadd.f32 %v311, %v204
  %v323 = vadd.f32 %v311, %v206
  %v324 = vadd.f32 %v311, %v290
  %s325 = scalar_lea.vmem %s1, 32
  %v326 = vld [vmem:[%s325] sm:$0xff]
  %v327 = vld [vmem:[%s325 + $0x8] sm:$0xff]
  %v328 = vld [vmem:[%s325 + $0x10] sm:$0xff]
  %v329 = vld [vmem:[%s325 + $0x18] sm:$0xff]
  %334 = vrot.lane.b32.xlu0 %v47, 127
  %v335 = vpop.permute.xlu0 %334
  %336 = vrot.lane.b32.xlu0 %v87, 127
  %v337 = vpop.permute.xlu0 %336
  %338 = vrot.lane.b32.xlu0 %v79, 127
  %v339 = vpop.permute.xlu0 %338
  %340 = vrot.lane.b32.xlu0 %v49, 127
  %v341 = vpop.permute.xlu0 %340
  %342 = vrot.lane.b32.xlu0 %v88, 127
  %v343 = vpop.permute.xlu0 %342
  %344 = vrot.lane.b32.xlu0 %v80, 127
  %v345 = vpop.permute.xlu0 %344
  %346 = vrot.lane.b32.xlu0 %v51, 127
  %v347 = vpop.permute.xlu0 %346
  %348 = vrot.lane.b32.xlu0 %v89, 127
  %v349 = vpop.permute.xlu0 %348
  %350 = vrot.lane.b32.xlu0 %v81, 127
  %v351 = vpop.permute.xlu0 %350
  %vm352 = vcmask 1039360
  %v353 = vsel %vm352, %v335, %v337
  %v354 = vsel %vm352, %v337, %v339
  %v355 = vsel %vm352, %v341, %v343
  %v356 = vsel %vm352, %v343, %v345
  %v357 = vsel %vm352, %v347, %v349
  %v358 = vsel %vm352, %v349, %v351
  %366 = vrot.lane.b32.xlu0 %v47, 43
  %v367 = vpop.permute.xlu0 %366
  %368 = vrot.lane.b32.xlu0 %v49, 43
  %v369 = vpop.permute.xlu0 %368
  %370 = vrot.lane.b32.xlu0 %v51, 43
  %v371 = vpop.permute.xlu0 %370
  %vm375 = vcmask 351232
  %v376 = vsel %vm375, %v339, %v367
  %v377 = vsel %vm375, %v345, %v369
  %v378 = vsel %vm375, %v351, %v371
  %v380 = vsel %vm78, %v326, 0
  %v383 = vsel %vm78, %v327, 0
  %v386 = vsel %vm78, %v328, 0
  %v389 = vsel %vm78, %v329, 0
  %v391 = vsel %vm110, %v357, 0
  %v393 = vsel %vm110, %v358, 0
  %v396 = vsel %vm110, %v378, 0
  %398 = vmatprep.subr.mxu0 %v354
  %399 = vmatpush1.msra.mxu0 %v353
  %400 = vmatprep.subr.mxu0 %v356
  %401 = vmatpush1.msra.mxu0 %v355
  %402 = vmatprep.subr.mxu0 %v393
  %403 = vmatpush1.msra.mxu0 %v391
  %404 = vmatprep.subr.mxu0 0.0
  %405 = vmatpush1.msra.mxu0 0.0
  %406 = vmatprep.subr.mxu0 0.0
  %407 = vmatpush1.msra.mxu0 0.0
  %408 = vmatprep.subr.mxu0 0.0
  %409 = vmatpush1.msra.mxu0 0.0
  %410 = vmatprep.subr.mxu0 0.0
  %411 = vmatpush1.msra.mxu0 0.0
  %412 = vmatprep.subr.mxu0 0.0
  %413 = vmatpush1.msra.mxu0 0.0
  %414 = vmatprep.subr.mxu0 0.0
  %415 = vmatpush1.msra.mxu0 0.0
  %416 = vmatprep.subr.mxu0 0.0
  %417 = vmatpush1.msra.mxu0 0.0
  %418 = vmatprep.subr.mxu0 0.0
  %419 = vmatpush1.msra.mxu0 0.0
  %420 = vmatprep.subr.mxu0 0.0
  %421 = vmatpush1.msra.mxu0 0.0
  %422 = vmatprep.subr.mxu0 0.0
  %423 = vmatpush1.msra.mxu0 0.0
  %424 = vmatprep.subr.mxu0 0.0
  %425 = vmatpush1.msra.mxu0 0.0
  %426 = vmatprep.subr.mxu0 0.0
  %427 = vmatpush1.msra.mxu0 0.0
  %428 = vmatprep.subr.mxu0 0.0
  %429 = vmatpush1.msra.mxu0 0.0
  %430 = vmatprep.subr.mxu0 0.0
  %431 = vmatpush1.msra.mxu0 0.0
  %432 = vmatprep.subr.mxu0 0.0
  %433 = vmatpush1.msra.mxu0 0.0
  %434 = vmatprep.subr.mxu0 0.0
  %435 = vmatpush1.msra.mxu0 0.0
  %436 = vmatprep.subr.mxu0 0.0
  %437 = vmatpush1.msra.mxu0 0.0
  %438 = vmatprep.subr.mxu0 0.0
  %439 = vmatpush1.msra.mxu0 0.0
  %440 = vmatprep.subr.mxu0 0.0
  %441 = vmatpush1.msra.mxu0 0.0
  %442 = vmatprep.subr.mxu0 0.0
  %443 = vmatpush1.msra.mxu0 0.0
  %444 = vmatprep.subr.mxu0 0.0
  %445 = vmatpush1.msra.mxu0 0.0
  %446 = vmatprep.subr.mxu0 0.0
  %447 = vmatpush1.msra.mxu0 0.0
  %448 = vmatprep.subr.mxu0 0.0
  %449 = vmatpush1.msra.mxu0 0.0
  %450 = vmatprep.subr.mxu0 0.0
  %451 = vmatpush1.msra.mxu0 0.0
  %452 = vmatprep.subr.mxu0 0.0
  %453 = vmatpush1.msra.mxu0 0.0
  %454 = vmatprep.subr.mxu0 0.0
  %455 = vmatpush1.msra.mxu0 0.0
  %456 = vmatprep.subr.mxu0 0.0
  %457 = vmatpush1.msra.mxu0 0.0
  %458 = vmatprep.subr.mxu0 0.0
  %459 = vmatpush1.msra.mxu0 0.0
  %460 = vmatprep.subr.mxu0 0.0
  %461 = vmatpush1.msra.mxu0 0.0
  %462 = vmatprep.mubr.f32.mxu0 0.0
  %463 = vmatmul.mubr.f32.gmra.mrb[0].mxu0 %v380
  %v464 = vpop.f32.mrb[0].mxu0
  %v465 = vadd.f32 0.0, %v464
  %v466 = vpop.f32.mrb[0].mxu0
  %v467 = vadd.f32 0.0, %v466
  %468 = vmatprep.mubr.f32.mxu0 0.0
  %469 = vmatmul.mubr.f32.gmra.mrb[0].mxu0 %v383
  %v470 = vpop.f32.mrb[0].mxu0
  %v471 = vadd.f32 0.0, %v470
  %v472 = vpop.f32.mrb[0].mxu0
  %v473 = vadd.f32 0.0, %v472
  %474 = vmatprep.mubr.f32.mxu0 0.0
  %475 = vmatmul.mubr.f32.gmra.mrb[0].mxu0 %v386
  %v476 = vpop.f32.mrb[0].mxu0
  %v477 = vadd.f32 0.0, %v476
  %v478 = vpop.f32.mrb[0].mxu0
  %v479 = vadd.f32 0.0, %v478
  %480 = vmatprep.mubr.f32.mxu0 0.0
  %481 = vmatmul.mubr.f32.gmra.mrb[0].mxu0 %v389
  %v482 = vpop.f32.mrb[0].mxu0
  %v483 = vadd.f32 0.0, %v482
  %v484 = vpop.f32.mrb[0].mxu0
  %v485 = vadd.f32 0.0, %v484
  %486 = vdwg.mxu0
  %487 = vmatprep.subr.mxu0 0.0
  %488 = vmatpush1.msra.mxu0 %v376
  %489 = vmatprep.subr.mxu0 0.0
  %490 = vmatpush1.msra.mxu0 %v377
  %491 = vmatprep.subr.mxu0 0.0
  %492 = vmatpush1.msra.mxu0 %v396
  %493 = vmatprep.subr.mxu0 0.0
  %494 = vmatpush1.msra.mxu0 0.0
  %495 = vmatprep.subr.mxu0 0.0
  %496 = vmatpush1.msra.mxu0 0.0
  %497 = vmatprep.subr.mxu0 0.0
  %498 = vmatpush1.msra.mxu0 0.0
  %499 = vmatprep.subr.mxu0 0.0
  %500 = vmatpush1.msra.mxu0 0.0
  %501 = vmatprep.subr.mxu0 0.0
  %502 = vmatpush1.msra.mxu0 0.0
  %503 = vmatprep.subr.mxu0 0.0
  %504 = vmatpush1.msra.mxu0 0.0
  %505 = vmatprep.subr.mxu0 0.0
  %506 = vmatpush1.msra.mxu0 0.0
  %507 = vmatprep.subr.mxu0 0.0
  %508 = vmatpush1.msra.mxu0 0.0
  %509 = vmatprep.subr.mxu0 0.0
  %510 = vmatpush1.msra.mxu0 0.0
  %511 = vmatprep.subr.mxu0 0.0
  %512 = vmatpush1.msra.mxu0 0.0
  %513 = vmatprep.subr.mxu0 0.0
  %514 = vmatpush1.msra.mxu0 0.0
  %515 = vmatprep.subr.mxu0 0.0
  %516 = vmatpush1.msra.mxu0 0.0
  %517 = vmatprep.subr.mxu0 0.0
  %518 = vmatpush1.msra.mxu0 0.0
  %519 = vmatprep.subr.mxu0 0.0
  %520 = vmatpush1.msra.mxu0 0.0
  %521 = vmatprep.subr.mxu0 0.0
  %522 = vmatpush1.msra.mxu0 0.0
  %523 = vmatprep.subr.mxu0 0.0
  %524 = vmatpush1.msra.mxu0 0.0
  %525 = vmatprep.subr.mxu0 0.0
  %526 = vmatpush1.msra.mxu0 0.0
  %527 = vmatprep.subr.mxu0 0.0
  %528 = vmatpush1.msra.mxu0 0.0
  %529 = vmatprep.subr.mxu0 0.0
  %530 = vmatpush1.msra.mxu0 0.0
  %531 = vmatprep.subr.mxu0 0.0
  %532 = vmatpush1.msra.mxu0 0.0
  %533 = vmatprep.subr.mxu0 0.0
  %534 = vmatpush1.msra.mxu0 0.0
  %535 = vmatprep.subr.mxu0 0.0
  %536 = vmatpush1.msra.mxu0 0.0
  %537 = vmatprep.subr.mxu0 0.0
  %538 = vmatpush1.msra.mxu0 0.0
  %539 = vmatprep.subr.mxu0 0.0
  %540 = vmatpush1.msra.mxu0 0.0
  %541 = vmatprep.subr.mxu0 0.0
  %542 = vmatpush1.msra.mxu0 0.0
  %543 = vmatprep.subr.mxu0 0.0
  %544 = vmatpush1.msra.mxu0 0.0
  %545 = vmatprep.subr.mxu0 0.0
  %546 = vmatpush1.msra.mxu0 0.0
  %547 = vmatprep.subr.mxu0 0.0
  %548 = vmatpush1.msra.mxu0 0.0
  %549 = vmatprep.subr.mxu0 0.0
  %550 = vmatpush1.msra.mxu0 0.0
  %551 = vmatprep.mubr.f32.mxu0 0.0
  %552 = vmatmul.mubr.f32.gmra.mrb[0].mxu0 %v380
  %v553 = vpop.f32.mrb[0].mxu0
  %v554 = vadd.f32 0.0, %v553
  %v555 = vpop.f32.mrb[0].mxu0
  %556 = vmatprep.mubr.f32.mxu0 0.0
  %557 = vmatmul.mubr.f32.gmra.mrb[0].mxu0 %v383
  %v558 = vpop.f32.mrb[0].mxu0
  %v559 = vadd.f32 0.0, %v558
  %v560 = vpop.f32.mrb[0].mxu0
  %561 = vmatprep.mubr.f32.mxu0 0.0
  %562 = vmatmul.mubr.f32.gmra.mrb[0].mxu0 %v386
  %v563 = vpop.f32.mrb[0].mxu0
  %v564 = vadd.f32 0.0, %v563
  %v565 = vpop.f32.mrb[0].mxu0
  %566 = vmatprep.mubr.f32.mxu0 0.0
  %567 = vmatmul.mubr.f32.gmra.mrb[0].mxu0 %v389
  %v568 = vpop.f32.mrb[0].mxu0
  %v569 = vadd.f32 0.0, %v568
  %v570 = vpop.f32.mrb[0].mxu0
  %571 = vdwg.mxu0
  %v572 = vadd.f32 %v313, %v465
  %v573 = vadd.f32 %v314, %v467
  %v574 = vadd.f32 %v315, %v554
  %v575 = vadd.f32 %v316, %v471
  %v576 = vadd.f32 %v317, %v473
  %v577 = vadd.f32 %v318, %v559
  %v578 = vadd.f32 %v319, %v477
  %v579 = vadd.f32 %v320, %v479
  %v580 = vadd.f32 %v321, %v564
  %v581 = vadd.f32 %v322, %v483
  %v582 = vadd.f32 %v323, %v485
  %v583 = vadd.f32 %v324, %v569
  %s584 = scalar_lea.vmem %s1, 64
  %v585 = vld [vmem:[%s584] sm:$0xff]
  %v586 = vld [vmem:[%s584 + $0x8] sm:$0xff]
  %v587 = vld [vmem:[%s584 + $0x10] sm:$0xff]
  %v588 = vld [vmem:[%s584 + $0x18] sm:$0xff]
  %589 = vrot.lane.b32.xlu0 %v47, 126
  %v590 = vpop.permute.xlu0 %589
  %591 = vrot.lane.b32.xlu0 %v87, 126
  %v592 = vpop.permute.xlu0 %591
  %593 = vrot.lane.b32.xlu0 %v79, 126
  %v594 = vpop.permute.xlu0 %593
  %595 = vrot.lane.b32.xlu0 %v49, 126
  %v596 = vpop.permute.xlu0 %595
  %597 = vrot.lane.b32.xlu0 %v88, 126
  %v598 = vpop.permute.xlu0 %597
  %599 = vrot.lane.b32.xlu0 %v80, 126
  %v600 = vpop.permute.xlu0 %599
  %601 = vrot.lane.b32.xlu0 %v51, 126
  %v602 = vpop.permute.xlu0 %601
  %603 = vrot.lane.b32.xlu0 %v89, 126
  %v604 = vpop.permute.xlu0 %603
  %605 = vrot.lane.b32.xlu0 %v81, 126
  %v606 = vpop.permute.xlu0 %605
  %vm607 = vcmask 1031168
  %v608 = vsel %vm607, %v590, %v592
  %v609 = vsel %vm607, %v592, %v594
  %v610 = vsel %vm607, %v596, %v598
  %v611 = vsel %vm607, %v598, %v600
  %v612 = vsel %vm607, %v602, %v604
  %v613 = vsel %vm607, %v604, %v606
  %621 = vrot.lane.b32.xlu0 %v47, 42
  %v622 = vpop.permute.xlu0 %621
  %623 = vrot.lane.b32.xlu0 %v49, 42
  %v624 = vpop.permute.xlu0 %623
  %625 = vrot.lane.b32.xlu0 %v51, 42
  %v626 = vpop.permute.xlu0 %625
  %vm630 = vcmask 343040
  %v631 = vsel %vm630, %v594, %v622
  %v632 = vsel %vm630, %v600, %v624
  %v633 = vsel %vm630, %v606, %v626
  %v635 = vsel %vm78, %v585, 0
  %v638 = vsel %vm78, %v586, 0
  %v641 = vsel %vm78, %v587, 0
  %v644 = vsel %vm78, %v588, 0
  %v646 = vsel %vm110, %v612, 0
  %v648 = vsel %vm110, %v613, 0
  %v651 = vsel %vm110, %v633, 0
  %653 = vmatprep.subr.mxu0 %v609
  %654 = vmatpush1.msra.mxu0 %v608
  %655 = vmatprep.subr.mxu0 %v611
  %656 = vmatpush1.msra.mxu0 %v610
  %657 = vmatprep.subr.mxu0 %v648
  %658 = vmatpush1.msra.mxu0 %v646
  %659 = vmatprep.subr.mxu0 0.0
  %660 = vmatpush1.msra.mxu0 0.0
  %661 = vmatprep.subr.mxu0 0.0
  %662 = vmatpush1.msra.mxu0 0.0
  %663 = vmatprep.subr.mxu0 0.0
  %664 = vmatpush1.msra.mxu0 0.0
  %665 = vmatprep.subr.mxu0 0.0
  %666 = vmatpush1.msra.mxu0 0.0
  %667 = vmatprep.subr.mxu0 0.0
  %668 = vmatpush1.msra.mxu0 0.0
  %669 = vmatprep.subr.mxu0 0.0
  %670 = vmatpush1.msra.mxu0 0.0
  %671 = vmatprep.subr.mxu0 0.0
  %672 = vmatpush1.msra.mxu0 0.0
  %673 = vmatprep.subr.mxu0 0.0
  %674 = vmatpush1.msra.mxu0 0.0
  %675 = vmatprep.subr.mxu0 0.0
  %676 = vmatpush1.msra.mxu0 0.0
  %677 = vmatprep.subr.mxu0 0.0
  %678 = vmatpush1.msra.mxu0 0.0
  %679 = vmatprep.subr.mxu0 0.0
  %680 = vmatpush1.msra.mxu0 0.0
  %681 = vmatprep.subr.mxu0 0.0
  %682 = vmatpush1.msra.mxu0 0.0
  %683 = vmatprep.subr.mxu0 0.0
  %684 = vmatpush1.msra.mxu0 0.0
  %685 = vmatprep.subr.mxu0 0.0
  %686 = vmatpush1.msra.mxu0 0.0
  %687 = vmatprep.subr.mxu0 0.0
  %688 = vmatpush1.msra.mxu0 0.0
  %689 = vmatprep.subr.mxu0 0.0
  %690 = vmatpush1.msra.mxu0 0.0
  %691 = vmatprep.subr.mxu0 0.0
  %692 = vmatpush1.msra.mxu0 0.0
  %693 = vmatprep.subr.mxu0 0.0
  %694 = vmatpush1.msra.mxu0 0.0
  %695 = vmatprep.subr.mxu0 0.0
  %696 = vmatpush1.msra.mxu0 0.0
  %697 = vmatprep.subr.mxu0 0.0
  %698 = vmatpush1.msra.mxu0 0.0
  %699 = vmatprep.subr.mxu0 0.0
  %700 = vmatpush1.msra.mxu0 0.0
  %701 = vmatprep.subr.mxu0 0.0
  %702 = vmatpush1.msra.mxu0 0.0
  %703 = vmatprep.subr.mxu0 0.0
  %704 = vmatpush1.msra.mxu0 0.0
  %705 = vmatprep.subr.mxu0 0.0
  %706 = vmatpush1.msra.mxu0 0.0
  %707 = vmatprep.subr.mxu0 0.0
  %708 = vmatpush1.msra.mxu0 0.0
  %709 = vmatprep.subr.mxu0 0.0
  %710 = vmatpush1.msra.mxu0 0.0
  %711 = vmatprep.subr.mxu0 0.0
  %712 = vmatpush1.msra.mxu0 0.0
  %713 = vmatprep.subr.mxu0 0.0
  %714 = vmatpush1.msra.mxu0 0.0
  %715 = vmatprep.subr.mxu0 0.0
  %716 = vmatpush1.msra.mxu0 0.0
  %717 = vmatprep.mubr.f32.mxu0 0.0
  %718 = vmatmul.mubr.f32.gmra.mrb[0].mxu0 %v635
  %v719 = vpop.f32.mrb[0].mxu0
  %v720 = vadd.f32 0.0, %v719
  %v721 = vpop.f32.mrb[0].mxu0
  %v722 = vadd.f32 0.0, %v721
  %723 = vmatprep.mubr.f32.mxu0 0.0
  %724 = vmatmul.mubr.f32.gmra.mrb[0].mxu0 %v638
  %v725 = vpop.f32.mrb[0].mxu0
  %v726 = vadd.f32 0.0, %v725
  %v727 = vpop.f32.mrb[0].mxu0
  %v728 = vadd.f32 0.0, %v727
  %729 = vmatprep.mubr.f32.mxu0 0.0
  %730 = vmatmul.mubr.f32.gmra.mrb[0].mxu0 %v641
  %v731 = vpop.f32.mrb[0].mxu0
  %v732 = vadd.f32 0.0, %v731
  %v733 = vpop.f32.mrb[0].mxu0
  %v734 = vadd.f32 0.0, %v733
  %735 = vmatprep.mubr.f32.mxu0 0.0
  %736 = vmatmul.mubr.f32.gmra.mrb[0].mxu0 %v644
  %v737 = vpop.f32.mrb[0].mxu0
  %v738 = vadd.f32 0.0, %v737
  %v739 = vpop.f32.mrb[0].mxu0
  %v740 = vadd.f32 0.0, %v739
  %741 = vdwg.mxu0
  %742 = vmatprep.subr.mxu0 0.0
  %743 = vmatpush1.msra.mxu0 %v631
  %744 = vmatprep.subr.mxu0 0.0
  %745 = vmatpush1.msra.mxu0 %v632
  %746 = vmatprep.subr.mxu0 0.0
  %747 = vmatpush1.msra.mxu0 %v651
  %748 = vmatprep.subr.mxu0 0.0
  %749 = vmatpush1.msra.mxu0 0.0
  %750 = vmatprep.subr.mxu0 0.0
  %751 = vmatpush1.msra.mxu0 0.0
  %752 = vmatprep.subr.mxu0 0.0
  %753 = vmatpush1.msra.mxu0 0.0
  %754 = vmatprep.subr.mxu0 0.0
  %755 = vmatpush1.msra.mxu0 0.0
  %756 = vmatprep.subr.mxu0 0.0
  %757 = vmatpush1.msra.mxu0 0.0
  %758 = vmatprep.subr.mxu0 0.0
  %759 = vmatpush1.msra.mxu0 0.0
  %760 = vmatprep.subr.mxu0 0.0
  %761 = vmatpush1.msra.mxu0 0.0
  %762 = vmatprep.subr.mxu0 0.0
  %763 = vmatpush1.msra.mxu0 0.0
  %764 = vmatprep.subr.mxu0 0.0
  %765 = vmatpush1.msra.mxu0 0.0
  %766 = vmatprep.subr.mxu0 0.0
  %767 = vmatpush1.msra.mxu0 0.0
  %768 = vmatprep.subr.mxu0 0.0
  %769 = vmatpush1.msra.mxu0 0.0
  %770 = vmatprep.subr.mxu0 0.0
  %771 = vmatpush1.msra.mxu0 0.0
  %772 = vmatprep.subr.mxu0 0.0
  %773 = vmatpush1.msra.mxu0 0.0
  %774 = vmatprep.subr.mxu0 0.0
  %775 = vmatpush1.msra.mxu0 0.0
  %776 = vmatprep.subr.mxu0 0.0
  %777 = vmatpush1.msra.mxu0 0.0
  %778 = vmatprep.subr.mxu0 0.0
  %779 = vmatpush1.msra.mxu0 0.0
  %780 = vmatprep.subr.mxu0 0.0
  %781 = vmatpush1.msra.mxu0 0.0
  %782 = vmatprep.subr.mxu0 0.0
  %783 = vmatpush1.msra.mxu0 0.0
  %784 = vmatprep.subr.mxu0 0.0
  %785 = vmatpush1.msra.mxu0 0.0
  %786 = vmatprep.subr.mxu0 0.0
  %787 = vmatpush1.msra.mxu0 0.0
  %788 = vmatprep.subr.mxu0 0.0
  %789 = vmatpush1.msra.mxu0 0.0
  %790 = vmatprep.subr.mxu0 0.0
  %791 = vmatpush1.msra.mxu0 0.0
  %792 = vmatprep.subr.mxu0 0.0
  %793 = vmatpush1.msra.mxu0 0.0
  %794 = vmatprep.subr.mxu0 0.0
  %795 = vmatpush1.msra.mxu0 0.0
  %796 = vmatprep.subr.mxu0 0.0
  %797 = vmatpush1.msra.mxu0 0.0
  %798 = vmatprep.subr.mxu0 0.0
  %799 = vmatpush1.msra.mxu0 0.0
  %800 = vmatprep.subr.mxu0 0.0
  %801 = vmatpush1.msra.mxu0 0.0
  %802 = vmatprep.subr.mxu0 0.0
  %803 = vmatpush1.msra.mxu0 0.0
  %804 = vmatprep.subr.mxu0 0.0
  %805 = vmatpush1.msra.mxu0 0.0
  %806 = vmatprep.mubr.f32.mxu0 0.0
  %807 = vmatmul.mubr.f32.gmra.mrb[0].mxu0 %v635
  %v808 = vpop.f32.mrb[0].mxu0
  %v809 = vadd.f32 0.0, %v808
  %v810 = vpop.f32.mrb[0].mxu0
  %811 = vmatprep.mubr.f32.mxu0 0.0
  %812 = vmatmul.mubr.f32.gmra.mrb[0].mxu0 %v638
  %v813 = vpop.f32.mrb[0].mxu0
  %v814 = vadd.f32 0.0, %v813
  %v815 = vpop.f32.mrb[0].mxu0
  %816 = vmatprep.mubr.f32.mxu0 0.0
  %817 = vmatmul.mubr.f32.gmra.mrb[0].mxu0 %v641
  %v818 = vpop.f32.mrb[0].mxu0
  %v819 = vadd.f32 0.0, %v818
  %v820 = vpop.f32.mrb[0].mxu0
  %821 = vmatprep.mubr.f32.mxu0 0.0
  %822 = vmatmul.mubr.f32.gmra.mrb[0].mxu0 %v644
  %v823 = vpop.f32.mrb[0].mxu0
  %v824 = vadd.f32 0.0, %v823
  %v825 = vpop.f32.mrb[0].mxu0
  %826 = vdwg.mxu0
  %v827 = vadd.f32 %v572, %v720
  %v828 = vadd.f32 %v573, %v722
  %v829 = vadd.f32 %v574, %v809
  %v830 = vadd.f32 %v575, %v726
  %v831 = vadd.f32 %v576, %v728
  %v832 = vadd.f32 %v577, %v814
  %v833 = vadd.f32 %v578, %v732
  %v834 = vadd.f32 %v579, %v734
  %v835 = vadd.f32 %v580, %v819
  %v836 = vadd.f32 %v581, %v738
  %v837 = vadd.f32 %v582, %v740
  %v838 = vadd.f32 %v583, %v824
  %s839 = scalar_lea.vmem %s1, 96
  %v840 = vld [vmem:[%s839] sm:$0xff]
  %v841 = vld [vmem:[%s839 + $0x8] sm:$0xff]
  %v842 = vld [vmem:[%s839 + $0x10] sm:$0xff]
  %v843 = vld [vmem:[%s839 + $0x18] sm:$0xff]
  %844 = vrot.lane.b32.xlu0 %v47, 125
  %v845 = vpop.permute.xlu0 %844
  %846 = vrot.lane.b32.xlu0 %v87, 125
  %v847 = vpop.permute.xlu0 %846
  %848 = vrot.lane.b32.xlu0 %v79, 125
  %v849 = vpop.permute.xlu0 %848
  %850 = vrot.lane.b32.xlu0 %v49, 125
  %v851 = vpop.permute.xlu0 %850
  %852 = vrot.lane.b32.xlu0 %v88, 125
  %v853 = vpop.permute.xlu0 %852
  %854 = vrot.lane.b32.xlu0 %v80, 125
  %v855 = vpop.permute.xlu0 %854
  %856 = vrot.lane.b32.xlu0 %v51, 125
  %v857 = vpop.permute.xlu0 %856
  %858 = vrot.lane.b32.xlu0 %v89, 125
  %v859 = vpop.permute.xlu0 %858
  %860 = vrot.lane.b32.xlu0 %v81, 125
  %v861 = vpop.permute.xlu0 %860
  %vm862 = vcmask 1022976
  %v863 = vsel %vm862, %v845, %v847
  %v864 = vsel %vm862, %v847, %v849
  %v865 = vsel %vm862, %v851, %v853
  %v866 = vsel %vm862, %v853, %v855
  %v867 = vsel %vm862, %v857, %v859
  %v868 = vsel %vm862, %v859, %v861
  %876 = vrot.lane.b32.xlu0 %v47, 41
  %v877 = vpop.permute.xlu0 %876
  %878 = vrot.lane.b32.xlu0 %v49, 41
  %v879 = vpop.permute.xlu0 %878
  %880 = vrot.lane.b32.xlu0 %v51, 41
  %v881 = vpop.permute.xlu0 %880
  %vm885 = vcmask 334848
  %v886 = vsel %vm885, %v849, %v877
  %v887 = vsel %vm885, %v855, %v879
  %v888 = vsel %vm885, %v861, %v881
  %v890 = vsel %vm78, %v840, 0
  %v893 = vsel %vm78, %v841, 0
  %v896 = vsel %vm78, %v842, 0
  %v899 = vsel %vm78, %v843, 0
  %v901 = vsel %vm110, %v867, 0
  %v903 = vsel %vm110, %v868, 0
  %v906 = vsel %vm110, %v888, 0
  %908 = vmatprep.subr.mxu0 %v864
  %909 = vmatpush1.msra.mxu0 %v863
  %910 = vmatprep.subr.mxu0 %v866
  %911 = vmatpush1.msra.mxu0 %v865
  %912 = vmatprep.subr.mxu0 %v903
  %913 = vmatpush1.msra.mxu0 %v901
  %914 = vmatprep.subr.mxu0 0.0
  %915 = vmatpush1.msra.mxu0 0.0
  %916 = vmatprep.subr.mxu0 0.0
  %917 = vmatpush1.msra.mxu0 0.0
  %918 = vmatprep.subr.mxu0 0.0
  %919 = vmatpush1.msra.mxu0 0.0
  %920 = vmatprep.subr.mxu0 0.0
  %921 = vmatpush1.msra.mxu0 0.0
  %922 = vmatprep.subr.mxu0 0.0
  %923 = vmatpush1.msra.mxu0 0.0
  %924 = vmatprep.subr.mxu0 0.0
  %925 = vmatpush1.msra.mxu0 0.0
  %926 = vmatprep.subr.mxu0 0.0
  %927 = vmatpush1.msra.mxu0 0.0
  %928 = vmatprep.subr.mxu0 0.0
  %929 = vmatpush1.msra.mxu0 0.0
  %930 = vmatprep.subr.mxu0 0.0
  %931 = vmatpush1.msra.mxu0 0.0
  %932 = vmatprep.subr.mxu0 0.0
  %933 = vmatpush1.msra.mxu0 0.0
  %934 = vmatprep.subr.mxu0 0.0
  %935 = vmatpush1.msra.mxu0 0.0
  %936 = vmatprep.subr.mxu0 0.0
  %937 = vmatpush1.msra.mxu0 0.0
  %938 = vmatprep.subr.mxu0 0.0
  %939 = vmatpush1.msra.mxu0 0.0
  %940 = vmatprep.subr.mxu0 0.0
  %941 = vmatpush1.msra.mxu0 0.0
  %942 = vmatprep.subr.mxu0 0.0
  %943 = vmatpush1.msra.mxu0 0.0
  %944 = vmatprep.subr.mxu0 0.0
  %945 = vmatpush1.msra.mxu0 0.0
  %946 = vmatprep.subr.mxu0 0.0
  %947 = vmatpush1.msra.mxu0 0.0
  %948 = vmatprep.subr.mxu0 0.0
  %949 = vmatpush1.msra.mxu0 0.0
  %950 = vmatprep.subr.mxu0 0.0
  %951 = vmatpush1.msra.mxu0 0.0
  %952 = vmatprep.subr.mxu0 0.0
  %953 = vmatpush1.msra.mxu0 0.0
  %954 = vmatprep.subr.mxu0 0.0
  %955 = vmatpush1.msra.mxu0 0.0
  %956 = vmatprep.subr.mxu0 0.0
  %957 = vmatpush1.msra.mxu0 0.0
  %958 = vmatprep.subr.mxu0 0.0
  %959 = vmatpush1.msra.mxu0 0.0
  %960 = vmatprep.subr.mxu0 0.0
  %961 = vmatpush1.msra.mxu0 0.0
  %962 = vmatprep.subr.mxu0 0.0
  %963 = vmatpush1.msra.mxu0 0.0
  %964 = vmatprep.subr.mxu0 0.0
  %965 = vmatpush1.msra.mxu0 0.0
  %966 = vmatprep.subr.mxu0 0.0
  %967 = vmatpush1.msra.mxu0 0.0
  %968 = vmatprep.subr.mxu0 0.0
  %969 = vmatpush1.msra.mxu0 0.0
  %970 = vmatprep.subr.mxu0 0.0
  %971 = vmatpush1.msra.mxu0 0.0
  %972 = vmatprep.mubr.f32.mxu0 0.0
  %973 = vmatmul.mubr.f32.gmra.mrb[0].mxu0 %v890
  %v974 = vpop.f32.mrb[0].mxu0
  %v975 = vadd.f32 0.0, %v974
  %v976 = vpop.f32.mrb[0].mxu0
  %v977 = vadd.f32 0.0, %v976
  %978 = vmatprep.mubr.f32.mxu0 0.0
  %979 = vmatmul.mubr.f32.gmra.mrb[0].mxu0 %v893
  %v980 = vpop.f32.mrb[0].mxu0
  %v981 = vadd.f32 0.0, %v980
  %v982 = vpop.f32.mrb[0].mxu0
  %v983 = vadd.f32 0.0, %v982
  %984 = vmatprep.mubr.f32.mxu0 0.0
  %985 = vmatmul.mubr.f32.gmra.mrb[0].mxu0 %v896
  %v986 = vpop.f32.mrb[0].mxu0
  %v987 = vadd.f32 0.0, %v986
  %v988 = vpop.f32.mrb[0].mxu0
  %v989 = vadd.f32 0.0, %v988
  %990 = vmatprep.mubr.f32.mxu0 0.0
  %991 = vmatmul.mubr.f32.gmra.mrb[0].mxu0 %v899
  %v992 = vpop.f32.mrb[0].mxu0
  %v993 = vadd.f32 0.0, %v992
  %v994 = vpop.f32.mrb[0].mxu0
  %v995 = vadd.f32 0.0, %v994
  %996 = vdwg.mxu0
  %997 = vmatprep.subr.mxu0 0.0
  %998 = vmatpush1.msra.mxu0 %v886
  %999 = vmatprep.subr.mxu0 0.0
  %1000 = vmatpush1.msra.mxu0 %v887
  %1001 = vmatprep.subr.mxu0 0.0
  %1002 = vmatpush1.msra.mxu0 %v906
  %1003 = vmatprep.subr.mxu0 0.0
  %1004 = vmatpush1.msra.mxu0 0.0
  %1005 = vmatprep.subr.mxu0 0.0
  %1006 = vmatpush1.msra.mxu0 0.0
  %1007 = vmatprep.subr.mxu0 0.0
  %1008 = vmatpush1.msra.mxu0 0.0
  %1009 = vmatprep.subr.mxu0 0.0
  %1010 = vmatpush1.msra.mxu0 0.0
  %1011 = vmatprep.subr.mxu0 0.0
  %1012 = vmatpush1.msra.mxu0 0.0
  %1013 = vmatprep.subr.mxu0 0.0
  %1014 = vmatpush1.msra.mxu0 0.0
  %1015 = vmatprep.subr.mxu0 0.0
  %1016 = vmatpush1.msra.mxu0 0.0
  %1017 = vmatprep.subr.mxu0 0.0
  %1018 = vmatpush1.msra.mxu0 0.0
  %1019 = vmatprep.subr.mxu0 0.0
  %1020 = vmatpush1.msra.mxu0 0.0
  %1021 = vmatprep.subr.mxu0 0.0
  %1022 = vmatpush1.msra.mxu0 0.0
  %1023 = vmatprep.subr.mxu0 0.0
  %1024 = vmatpush1.msra.mxu0 0.0
  %1025 = vmatprep.subr.mxu0 0.0
  %1026 = vmatpush1.msra.mxu0 0.0
  %1027 = vmatprep.subr.mxu0 0.0
  %1028 = vmatpush1.msra.mxu0 0.0
  %1029 = vmatprep.subr.mxu0 0.0
  %1030 = vmatpush1.msra.mxu0 0.0
  %1031 = vmatprep.subr.mxu0 0.0
  %1032 = vmatpush1.msra.mxu0 0.0
  %1033 = vmatprep.subr.mxu0 0.0
  %1034 = vmatpush1.msra.mxu0 0.0
  %1035 = vmatprep.subr.mxu0 0.0
  %1036 = vmatpush1.msra.mxu0 0.0
  %1037 = vmatprep.subr.mxu0 0.0
  %1038 = vmatpush1.msra.mxu0 0.0
  %1039 = vmatprep.subr.mxu0 0.0
  %1040 = vmatpush1.msra.mxu0 0.0
  %1041 = vmatprep.subr.mxu0 0.0
  %1042 = vmatpush1.msra.mxu0 0.0
  %1043 = vmatprep.subr.mxu0 0.0
  %1044 = vmatpush1.msra.mxu0 0.0
  %1045 = vmatprep.subr.mxu0 0.0
  %1046 = vmatpush1.msra.mxu0 0.0
  %1047 = vmatprep.subr.mxu0 0.0
  %1048 = vmatpush1.msra.mxu0 0.0
  %1049 = vmatprep.subr.mxu0 0.0
  %1050 = vmatpush1.msra.mxu0 0.0
  %1051 = vmatprep.subr.mxu0 0.0
  %1052 = vmatpush1.msra.mxu0 0.0
  %1053 = vmatprep.subr.mxu0 0.0
  %1054 = vmatpush1.msra.mxu0 0.0
  %1055 = vmatprep.subr.mxu0 0.0
  %1056 = vmatpush1.msra.mxu0 0.0
  %1057 = vmatprep.subr.mxu0 0.0
  %1058 = vmatpush1.msra.mxu0 0.0
  %1059 = vmatprep.subr.mxu0 0.0
  %1060 = vmatpush1.msra.mxu0 0.0
  %1061 = vmatprep.mubr.f32.mxu0 0.0
  %1062 = vmatmul.mubr.f32.gmra.mrb[0].mxu0 %v890
  %v1063 = vpop.f32.mrb[0].mxu0
  %v1064 = vadd.f32 0.0, %v1063
  %v1065 = vpop.f32.mrb[0].mxu0
  %1066 = vmatprep.mubr.f32.mxu0 0.0
  %1067 = vmatmul.mubr.f32.gmra.mrb[0].mxu0 %v893
  %v1068 = vpop.f32.mrb[0].mxu0
  %v1069 = vadd.f32 0.0, %v1068
  %v1070 = vpop.f32.mrb[0].mxu0
  %1071 = vmatprep.mubr.f32.mxu0 0.0
  %1072 = vmatmul.mubr.f32.gmra.mrb[0].mxu0 %v896
  %v1073 = vpop.f32.mrb[0].mxu0
  %v1074 = vadd.f32 0.0, %v1073
  %v1075 = vpop.f32.mrb[0].mxu0
  %1076 = vmatprep.mubr.f32.mxu0 0.0
  %1077 = vmatmul.mubr.f32.gmra.mrb[0].mxu0 %v899
  %v1078 = vpop.f32.mrb[0].mxu0
  %v1079 = vadd.f32 0.0, %v1078
  %v1080 = vpop.f32.mrb[0].mxu0
  %1081 = vdwg.mxu0
  %v1082 = vadd.f32 %v827, %v975
  %v1083 = vadd.f32 %v828, %v977
  %v1084 = vadd.f32 %v829, %v1064
  %v1085 = vadd.f32 %v830, %v981
  %v1086 = vadd.f32 %v831, %v983
  %v1087 = vadd.f32 %v832, %v1069
  %v1088 = vadd.f32 %v833, %v987
  %v1089 = vadd.f32 %v834, %v989
  %v1090 = vadd.f32 %v835, %v1074
  %v1091 = vadd.f32 %v836, %v993
  %v1092 = vadd.f32 %v837, %v995
  %v1093 = vadd.f32 %v838, %v1079
  %s1094 = scalar_lea.vmem %s1, 128
  %v1095 = vld [vmem:[%s1094] sm:$0xff]
  %v1096 = vld [vmem:[%s1094 + $0x8] sm:$0xff]
  %v1097 = vld [vmem:[%s1094 + $0x10] sm:$0xff]
  %v1098 = vld [vmem:[%s1094 + $0x18] sm:$0xff]
  %1099 = vrot.lane.b32.xlu0 %v47, 124
  %v1100 = vpop.permute.xlu0 %1099
  %1101 = vrot.lane.b32.xlu0 %v87, 124
  %v1102 = vpop.permute.xlu0 %1101
  %1103 = vrot.lane.b32.xlu0 %v79, 124
  %v1104 = vpop.permute.xlu0 %1103
  %1105 = vrot.lane.b32.xlu0 %v49, 124
  %v1106 = vpop.permute.xlu0 %1105
  %1107 = vrot.lane.b32.xlu0 %v88, 124
  %v1108 = vpop.permute.xlu0 %1107
  %1109 = vrot.lane.b32.xlu0 %v80, 124
  %v1110 = vpop.permute.xlu0 %1109
  %1111 = vrot.lane.b32.xlu0 %v51, 124
  %v1112 = vpop.permute.xlu0 %1111
  %1113 = vrot.lane.b32.xlu0 %v89, 124
  %v1114 = vpop.permute.xlu0 %1113
  %1115 = vrot.lane.b32.xlu0 %v81, 124
  %v1116 = vpop.permute.xlu0 %1115
  %vm1117 = vcmask 1014784
  %v1118 = vsel %vm1117, %v1100, %v1102
  %v1119 = vsel %vm1117, %v1102, %v1104
  %v1120 = vsel %vm1117, %v1106, %v1108
  %v1121 = vsel %vm1117, %v1108, %v1110
  %v1122 = vsel %vm1117, %v1112, %v1114
  %v1123 = vsel %vm1117, %v1114, %v1116
  %1131 = vrot.lane.b32.xlu0 %v47, 40
  %v1132 = vpop.permute.xlu0 %1131
  %1133 = vrot.lane.b32.xlu0 %v49, 40
  %v1134 = vpop.permute.xlu0 %1133
  %1135 = vrot.lane.b32.xlu0 %v51, 40
  %v1136 = vpop.permute.xlu0 %1135
  %vm1140 = vcmask 326656
  %v1141 = vsel %vm1140, %v1104, %v1132
  %v1142 = vsel %vm1140, %v1110, %v1134
  %v1143 = vsel %vm1140, %v1116, %v1136
  %v1145 = vsel %vm78, %v1095, 0
  %v1148 = vsel %vm78, %v1096, 0
  %v1151 = vsel %vm78, %v1097, 0
  %v1154 = vsel %vm78, %v1098, 0
  %v1156 = vsel %vm110, %v1122, 0
  %v1158 = vsel %vm110, %v1123, 0
  %v1161 = vsel %vm110, %v1143, 0
  %1163 = vmatprep.subr.mxu0 %v1119
  %1164 = vmatpush1.msra.mxu0 %v1118
  %1165 = vmatprep.subr.mxu0 %v1121
  %1166 = vmatpush1.msra.mxu0 %v1120
  %1167 = vmatprep.subr.mxu0 %v1158
  %1168 = vmatpush1.msra.mxu0 %v1156
  %1169 = vmatprep.subr.mxu0 0.0
  %1170 = vmatpush1.msra.mxu0 0.0
  %1171 = vmatprep.subr.mxu0 0.0
  %1172 = vmatpush1.msra.mxu0 0.0
  %1173 = vmatprep.subr.mxu0 0.0
  %1174 = vmatpush1.msra.mxu0 0.0
  %1175 = vmatprep.subr.mxu0 0.0
  %1176 = vmatpush1.msra.mxu0 0.0
  %1177 = vmatprep.subr.mxu0 0.0
  %1178 = vmatpush1.msra.mxu0 0.0
  %1179 = vmatprep.subr.mxu0 0.0
  %1180 = vmatpush1.msra.mxu0 0.0
  %1181 = vmatprep.subr.mxu0 0.0
  %1182 = vmatpush1.msra.mxu0 0.0
  %1183 = vmatprep.subr.mxu0 0.0
  %1184 = vmatpush1.msra.mxu0 0.0
  %1185 = vmatprep.subr.mxu0 0.0
  %1186 = vmatpush1.msra.mxu0 0.0
  %1187 = vmatprep.subr.mxu0 0.0
  %1188 = vmatpush1.msra.mxu0 0.0
  %1189 = vmatprep.subr.mxu0 0.0
  %1190 = vmatpush1.msra.mxu0 0.0
  %1191 = vmatprep.subr.mxu0 0.0
  %1192 = vmatpush1.msra.mxu0 0.0
  %1193 = vmatprep.subr.mxu0 0.0
  %1194 = vmatpush1.msra.mxu0 0.0
  %1195 = vmatprep.subr.mxu0 0.0
  %1196 = vmatpush1.msra.mxu0 0.0
  %1197 = vmatprep.subr.mxu0 0.0
  %1198 = vmatpush1.msra.mxu0 0.0
  %1199 = vmatprep.subr.mxu0 0.0
  %1200 = vmatpush1.msra.mxu0 0.0
  %1201 = vmatprep.subr.mxu0 0.0
  %1202 = vmatpush1.msra.mxu0 0.0
  %1203 = vmatprep.subr.mxu0 0.0
  %1204 = vmatpush1.msra.mxu0 0.0
  %1205 = vmatprep.subr.mxu0 0.0
  %1206 = vmatpush1.msra.mxu0 0.0
  %1207 = vmatprep.subr.mxu0 0.0
  %1208 = vmatpush1.msra.mxu0 0.0
  %1209 = vmatprep.subr.mxu0 0.0
  %1210 = vmatpush1.msra.mxu0 0.0
  %1211 = vmatprep.subr.mxu0 0.0
  %1212 = vmatpush1.msra.mxu0 0.0
  %1213 = vmatprep.subr.mxu0 0.0
  %1214 = vmatpush1.msra.mxu0 0.0
  %1215 = vmatprep.subr.mxu0 0.0
  %1216 = vmatpush1.msra.mxu0 0.0
  %1217 = vmatprep.subr.mxu0 0.0
  %1218 = vmatpush1.msra.mxu0 0.0
  %1219 = vmatprep.subr.mxu0 0.0
  %1220 = vmatpush1.msra.mxu0 0.0
  %1221 = vmatprep.subr.mxu0 0.0
  %1222 = vmatpush1.msra.mxu0 0.0
  %1223 = vmatprep.subr.mxu0 0.0
  %1224 = vmatpush1.msra.mxu0 0.0
  %1225 = vmatprep.subr.mxu0 0.0
  %1226 = vmatpush1.msra.mxu0 0.0
  %1227 = vmatprep.mubr.f32.mxu0 0.0
  %1228 = vmatmul.mubr.f32.gmra.mrb[0].mxu0 %v1145
  %v1229 = vpop.f32.mrb[0].mxu0
  %v1230 = vadd.f32 0.0, %v1229
  %v1231 = vpop.f32.mrb[0].mxu0
  %v1232 = vadd.f32 0.0, %v1231
  %1233 = vmatprep.mubr.f32.mxu0 0.0
  %1234 = vmatmul.mubr.f32.gmra.mrb[0].mxu0 %v1148
  %v1235 = vpop.f32.mrb[0].mxu0
  %v1236 = vadd.f32 0.0, %v1235
  %v1237 = vpop.f32.mrb[0].mxu0
  %v1238 = vadd.f32 0.0, %v1237
  %1239 = vmatprep.mubr.f32.mxu0 0.0
  %1240 = vmatmul.mubr.f32.gmra.mrb[0].mxu0 %v1151
  %v1241 = vpop.f32.mrb[0].mxu0
  %v1242 = vadd.f32 0.0, %v1241
  %v1243 = vpop.f32.mrb[0].mxu0
  %v1244 = vadd.f32 0.0, %v1243
  %1245 = vmatprep.mubr.f32.mxu0 0.0
  %1246 = vmatmul.mubr.f32.gmra.mrb[0].mxu0 %v1154
  %v1247 = vpop.f32.mrb[0].mxu0
  %v1248 = vadd.f32 0.0, %v1247
  %v1249 = vpop.f32.mrb[0].mxu0
  %v1250 = vadd.f32 0.0, %v1249
  %1251 = vdwg.mxu0
  %1252 = vmatprep.subr.mxu0 0.0
  %1253 = vmatpush1.msra.mxu0 %v1141
  %1254 = vmatprep.subr.mxu0 0.0
  %1255 = vmatpush1.msra.mxu0 %v1142
  %1256 = vmatprep.subr.mxu0 0.0
  %1257 = vmatpush1.msra.mxu0 %v1161
  %1258 = vmatprep.subr.mxu0 0.0
  %1259 = vmatpush1.msra.mxu0 0.0
  %1260 = vmatprep.subr.mxu0 0.0
  %1261 = vmatpush1.msra.mxu0 0.0
  %1262 = vmatprep.subr.mxu0 0.0
  %1263 = vmatpush1.msra.mxu0 0.0
  %1264 = vmatprep.subr.mxu0 0.0
  %1265 = vmatpush1.msra.mxu0 0.0
  %1266 = vmatprep.subr.mxu0 0.0
  %1267 = vmatpush1.msra.mxu0 0.0
  %1268 = vmatprep.subr.mxu0 0.0
  %1269 = vmatpush1.msra.mxu0 0.0
  %1270 = vmatprep.subr.mxu0 0.0
  %1271 = vmatpush1.msra.mxu0 0.0
  %1272 = vmatprep.subr.mxu0 0.0
  %1273 = vmatpush1.msra.mxu0 0.0
  %1274 = vmatprep.subr.mxu0 0.0
  %1275 = vmatpush1.msra.mxu0 0.0
  %1276 = vmatprep.subr.mxu0 0.0
  %1277 = vmatpush1.msra.mxu0 0.0
  %1278 = vmatprep.subr.mxu0 0.0
  %1279 = vmatpush1.msra.mxu0 0.0
  %1280 = vmatprep.subr.mxu0 0.0
  %1281 = vmatpush1.msra.mxu0 0.0
  %1282 = vmatprep.subr.mxu0 0.0
  %1283 = vmatpush1.msra.mxu0 0.0
  %1284 = vmatprep.subr.mxu0 0.0
  %1285 = vmatpush1.msra.mxu0 0.0
  %1286 = vmatprep.subr.mxu0 0.0
  %1287 = vmatpush1.msra.mxu0 0.0
  %1288 = vmatprep.subr.mxu0 0.0
  %1289 = vmatpush1.msra.mxu0 0.0
  %1290 = vmatprep.subr.mxu0 0.0
  %1291 = vmatpush1.msra.mxu0 0.0
  %1292 = vmatprep.subr.mxu0 0.0
  %1293 = vmatpush1.msra.mxu0 0.0
  %1294 = vmatprep.subr.mxu0 0.0
  %1295 = vmatpush1.msra.mxu0 0.0
  %1296 = vmatprep.subr.mxu0 0.0
  %1297 = vmatpush1.msra.mxu0 0.0
  %1298 = vmatprep.subr.mxu0 0.0
  %1299 = vmatpush1.msra.mxu0 0.0
  %1300 = vmatprep.subr.mxu0 0.0
  %1301 = vmatpush1.msra.mxu0 0.0
  %1302 = vmatprep.subr.mxu0 0.0
  %1303 = vmatpush1.msra.mxu0 0.0
  %1304 = vmatprep.subr.mxu0 0.0
  %1305 = vmatpush1.msra.mxu0 0.0
  %1306 = vmatprep.subr.mxu0 0.0
  %1307 = vmatpush1.msra.mxu0 0.0
  %1308 = vmatprep.subr.mxu0 0.0
  %1309 = vmatpush1.msra.mxu0 0.0
  %1310 = vmatprep.subr.mxu0 0.0
  %1311 = vmatpush1.msra.mxu0 0.0
  %1312 = vmatprep.subr.mxu0 0.0
  %1313 = vmatpush1.msra.mxu0 0.0
  %1314 = vmatprep.subr.mxu0 0.0
  %1315 = vmatpush1.msra.mxu0 0.0
  %1316 = vmatprep.mubr.f32.mxu0 0.0
  %1317 = vmatmul.mubr.f32.gmra.mrb[0].mxu0 %v1145
  %v1318 = vpop.f32.mrb[0].mxu0
  %v1319 = vadd.f32 0.0, %v1318
  %v1320 = vpop.f32.mrb[0].mxu0
  %1321 = vmatprep.mubr.f32.mxu0 0.0
  %1322 = vmatmul.mubr.f32.gmra.mrb[0].mxu0 %v1148
  %v1323 = vpop.f32.mrb[0].mxu0
  %v1324 = vadd.f32 0.0, %v1323
  %v1325 = vpop.f32.mrb[0].mxu0
  %1326 = vmatprep.mubr.f32.mxu0 0.0
  %1327 = vmatmul.mubr.f32.gmra.mrb[0].mxu0 %v1151
  %v1328 = vpop.f32.mrb[0].mxu0
  %v1329 = vadd.f32 0.0, %v1328
  %v1330 = vpop.f32.mrb[0].mxu0
  %1331 = vmatprep.mubr.f32.mxu0 0.0
  %1332 = vmatmul.mubr.f32.gmra.mrb[0].mxu0 %v1154
  %v1333 = vpop.f32.mrb[0].mxu0
  %v1334 = vadd.f32 0.0, %v1333
  %v1335 = vpop.f32.mrb[0].mxu0
  %1336 = vdwg.mxu0
  %v1337 = vadd.f32 %v1082, %v1230
  %v1338 = vadd.f32 %v1083, %v1232
  %v1339 = vadd.f32 %v1084, %v1319
  %v1340 = vadd.f32 %v1085, %v1236
  %v1341 = vadd.f32 %v1086, %v1238
  %v1342 = vadd.f32 %v1087, %v1324
  %v1343 = vadd.f32 %v1088, %v1242
  %v1344 = vadd.f32 %v1089, %v1244
  %v1345 = vadd.f32 %v1090, %v1329
  %v1346 = vadd.f32 %v1091, %v1248
  %v1347 = vadd.f32 %v1092, %v1250
  %v1348 = vadd.f32 %v1093, %v1334
  %v1349 = vmax.f32 %v1337, 0.0
  %v1350 = vmax.f32 %v1338, 0.0
  %v1351 = vmax.f32 %v1339, 0.0
  %v1352 = vmax.f32 %v1340, 0.0
  %v1353 = vmax.f32 %v1341, 0.0
  %v1354 = vmax.f32 %v1342, 0.0
  %v1355 = vmax.f32 %v1343, 0.0
  %v1356 = vmax.f32 %v1344, 0.0
  %v1357 = vmax.f32 %v1345, 0.0
  %v1358 = vmax.f32 %v1346, 0.0
  %v1359 = vmax.f32 %v1347, 0.0
  %v1360 = vmax.f32 %v1348, 0.0
  %1373 = vrot.lane.b32.xlu0 %v1349, 126
  %v1374 = vpop.permute.xlu0 %1373
  %1375 = vrot.lane.b32.xlu0 %v1350, 126
  %v1376 = vpop.permute.xlu0 %1375
  %1377 = vrot.lane.b32.xlu0 %v1351, 126
  %v1378 = vpop.permute.xlu0 %1377
  %1379 = vrot.lane.b32.xlu0 %v1352, 126
  %v1380 = vpop.permute.xlu0 %1379
  %1381 = vrot.lane.b32.xlu0 %v1353, 126
  %v1382 = vpop.permute.xlu0 %1381
  %1383 = vrot.lane.b32.xlu0 %v1354, 126
  %v1384 = vpop.permute.xlu0 %1383
  %1385 = vrot.lane.b32.xlu0 %v1355, 126
  %v1386 = vpop.permute.xlu0 %1385
  %1387 = vrot.lane.b32.xlu0 %v1356, 126
  %v1388 = vpop.permute.xlu0 %1387
  %1389 = vrot.lane.b32.xlu0 %v1357, 126
  %v1390 = vpop.permute.xlu0 %1389
  %1391 = vrot.lane.b32.xlu0 %v1358, 126
  %v1392 = vpop.permute.xlu0 %1391
  %1393 = vrot.lane.b32.xlu0 %v1359, 126
  %v1394 = vpop.permute.xlu0 %1393
  %1395 = vrot.lane.b32.xlu0 %v1360, 126
  %v1396 = vpop.permute.xlu0 %1395
  %v1397 = vsel %vm607, %v1374, %v1376
  %v1398 = vsel %vm607, %v1376, %v1378
  %v1399 = vsel %vm607, %v1380, %v1382
  %v1400 = vsel %vm607, %v1382, %v1384
  %v1401 = vsel %vm607, %v1386, %v1388
  %v1402 = vsel %vm607, %v1388, %v1390
  %v1403 = vsel %vm607, %v1392, %v1394
  %v1404 = vsel %vm607, %v1394, %v1396
  %1417 = vrot.lane.b32.xlu0 %v1349, 42
  %v1418 = vpop.permute.xlu0 %1417
  %1419 = vrot.lane.b32.xlu0 %v1352, 42
  %v1420 = vpop.permute.xlu0 %1419
  %1421 = vrot.lane.b32.xlu0 %v1355, 42
  %v1422 = vpop.permute.xlu0 %1421
  %1423 = vrot.lane.b32.xlu0 %v1358, 42
  %v1424 = vpop.permute.xlu0 %1423
  %v1429 = vsel %vm630, %v1378, %v1418
  %v1430 = vsel %vm630, %v1384, %v1420
  %v1431 = vsel %vm630, %v1390, %v1422
  %v1432 = vsel %vm630, %v1396, %v1424
  %1433 = vrot.lane.b32.xlu0 %v1349, 124
  %v1434 = vpop.permute.xlu0 %1433
  %1435 = vrot.lane.b32.xlu0 %v1350, 124
  %v1436 = vpop.permute.xlu0 %1435
  %1437 = vrot.lane.b32.xlu0 %v1351, 124
  %v1438 = vpop.permute.xlu0 %1437
  %1439 = vrot.lane.b32.xlu0 %v1352, 124
  %v1440 = vpop.permute.xlu0 %1439
  %1441 = vrot.lane.b32.xlu0 %v1353, 124
  %v1442 = vpop.permute.xlu0 %1441
  %1443 = vrot.lane.b32.xlu0 %v1354, 124
  %v1444 = vpop.permute.xlu0 %1443
  %1445 = vrot.lane.b32.xlu0 %v1355, 124
  %v1446 = vpop.permute.xlu0 %1445
  %1447 = vrot.lane.b32.xlu0 %v1356, 124
  %v1448 = vpop.permute.xlu0 %1447
  %1449 = vrot.lane.b32.xlu0 %v1357, 124
  %v1450 = vpop.permute.xlu0 %1449
  %1451 = vrot.lane.b32.xlu0 %v1358, 124
  %v1452 = vpop.permute.xlu0 %1451
  %1453 = vrot.lane.b32.xlu0 %v1359, 124
  %v1454 = vpop.permute.xlu0 %1453
  %1455 = vrot.lane.b32.xlu0 %v1360, 124
  %v1456 = vpop.permute.xlu0 %1455
  %v1457 = vsel %vm1117, %v1434, %v1436
  %v1458 = vsel %vm1117, %v1436, %v1438
  %v1459 = vsel %vm1117, %v1440, %v1442
  %v1460 = vsel %vm1117, %v1442, %v1444
  %v1461 = vsel %vm1117, %v1446, %v1448
  %v1462 = vsel %vm1117, %v1448, %v1450
  %v1463 = vsel %vm1117, %v1452, %v1454
  %v1464 = vsel %vm1117, %v1454, %v1456
  %1477 = vrot.lane.b32.xlu0 %v1349, 40
  %v1478 = vpop.permute.xlu0 %1477
  %1479 = vrot.lane.b32.xlu0 %v1352, 40
  %v1480 = vpop.permute.xlu0 %1479
  %1481 = vrot.lane.b32.xlu0 %v1355, 40
  %v1482 = vpop.permute.xlu0 %1481
  %1483 = vrot.lane.b32.xlu0 %v1358, 40
  %v1484 = vpop.permute.xlu0 %1483
  %v1489 = vsel %vm1140, %v1438, %v1478
  %v1490 = vsel %vm1140, %v1444, %v1480
  %v1491 = vsel %vm1140, %v1450, %v1482
  %v1492 = vsel %vm1140, %v1456, %v1484
  %v1493 = vmax.f32 %v1397, %v1457
  %v1494 = vmax.f32 %v1398, %v1458
  %v1495 = vmax.f32 %v1429, %v1489
  %v1496 = vmax.f32 %v1399, %v1459
  %v1497 = vmax.f32 %v1400, %v1460
  %v1498 = vmax.f32 %v1430, %v1490
  %v1499 = vmax.f32 %v1401, %v1461
  %v1500 = vmax.f32 %v1402, %v1462
  %v1501 = vmax.f32 %v1431, %v1491
  %v1502 = vmax.f32 %v1403, %v1463
  %v1503 = vmax.f32 %v1404, %v1464
  %v1504 = vmax.f32 %v1432, %v1492
  %v1505 = vmax.f32 %v1349, %v1493
  %v1506 = vmax.f32 %v1350, %v1494
  %v1507 = vmax.f32 %v1351, %v1495
  %v1508 = vmax.f32 %v1352, %v1496
  %v1509 = vmax.f32 %v1353, %v1497
  %v1510 = vmax.f32 %v1354, %v1498
  %v1511 = vmax.f32 %v1355, %v1499
  %v1512 = vmax.f32 %v1356, %v1500
  %v1513 = vmax.f32 %v1357, %v1501
  %v1514 = vmax.f32 %v1358, %v1502
  %v1515 = vmax.f32 %v1359, %v1503
  %v1516 = vmax.f32 %v1360, %v1504
  %v1517 = vld [vmem:[%s11] sm:$0xff]
  %v1518 = vld [vmem:[%s11 + $0x8] sm:$0xff]
  %v1519 = vld [vmem:[%s11 + $0x10] sm:$0xff]
  %v1520 = vld [vmem:[%s11 + $0x18] sm:$0xff]
  %v1521 = vld [vmem:[%s11 + $0x20] sm:$0xff]
  %v1522 = vld [vmem:[%s11 + $0x28] sm:$0xff]
  %v1523 = vld [vmem:[%s11 + $0x30] sm:$0xff]
  %v1524 = vld [vmem:[%s11 + $0x38] sm:$0xff]
  %v1525 = vld [vmem:[%s11 + $0x40] sm:$0xff]
  %v1526 = vld [vmem:[%s11 + $0x48] sm:$0xff]
  %v1527 = vld [vmem:[%s11 + $0x50] sm:$0xff]
  %v1528 = vld [vmem:[%s11 + $0x58] sm:$0xff]
  %v1529 = vld [vmem:[%s11 + $0x60] sm:$0xff]
  %v1530 = vld [vmem:[%s11 + $0x68] sm:$0xff]
  %v1531 = vld [vmem:[%s11 + $0x70] sm:$0xff]
  %v1532 = vld [vmem:[%s11 + $0x78] sm:$0xff]
  %v1533 = vld [vmem:[%s11 + $0x80] sm:$0xff]
  %v1534 = vld [vmem:[%s11 + $0x88] sm:$0xff]
  %v1535 = vld [vmem:[%s11 + $0x90] sm:$0xff]
  %v1536 = vld [vmem:[%s11 + $0x98] sm:$0xff]
  %v1537 = vld [vmem:[%s11 + $0xa0] sm:$0xff]
  %v1538 = vld [vmem:[%s11 + $0xa8] sm:$0xff]
  %v1539 = vld [vmem:[%s11 + $0xb0] sm:$0xff]
  %v1540 = vld [vmem:[%s11 + $0xb8] sm:$0xff]
  %v1541 = vld [vmem:[%s11 + $0xc0] sm:$0xff]
  %v1542 = vld [vmem:[%s11 + $0xc8] sm:$0xff]
  %v1543 = vld [vmem:[%s11 + $0xd0] sm:$0xff]
  %v1544 = vld [vmem:[%s11 + $0xd8] sm:$0xff]
  %v1545 = vld [vmem:[%s11 + $0xe0] sm:$0xff]
  %v1546 = vld [vmem:[%s11 + $0xe8] sm:$0xff]
  %v1547 = vld [vmem:[%s11 + $0xf0] sm:$0xff]
  %v1548 = vld [vmem:[%s11 + $0xf8] sm:$0xff]
  %v1549 = vld [vmem:[%s11 + $0x100] sm:$0xff]
  %v1550 = vld [vmem:[%s11 + $0x108] sm:$0xff]
  %v1551 = vld [vmem:[%s11 + $0x110] sm:$0xff]
  %v1552 = vld [vmem:[%s11 + $0x118] sm:$0xff]
  %v1553 = vld [vmem:[%s11 + $0x120] sm:$0xff]
  %v1554 = vld [vmem:[%s11 + $0x128] sm:$0xf]
  %vm1555 = vcmask 359424
  %v1557 = vsel %vm1555, %v1507, 0
  %v1560 = vsel %vm1555, %v1510, 0
  %v1563 = vsel %vm1555, %v1513, 0
  %v1566 = vsel %vm1555, %v1516, 0
  %vm1568 = vcmask 1043456
  %v1570 = vsel %vm1568, %v1554, 0
  %1572 = vmatprep.subr.mxu0 0.0
  %1573 = vmatpush1.msra.mxu0 %v1517
  %1574 = vmatprep.subr.mxu0 0.0
  %1575 = vmatpush1.msra.mxu0 %v1518
  %1576 = vmatprep.subr.mxu0 0.0
  %1577 = vmatpush1.msra.mxu0 %v1519
  %1578 = vmatprep.subr.mxu0 0.0
  %1579 = vmatpush1.msra.mxu0 %v1520
  %1580 = vmatprep.subr.mxu0 0.0
  %1581 = vmatpush1.msra.mxu0 %v1521
  %1582 = vmatprep.subr.mxu0 0.0
  %1583 = vmatpush1.msra.mxu0 %v1522
  %1584 = vmatprep.subr.mxu0 0.0
  %1585 = vmatpush1.msra.mxu0 %v1523
  %1586 = vmatprep.subr.mxu0 0.0
  %1587 = vmatpush1.msra.mxu0 %v1524
  %1588 = vmatprep.subr.mxu0 0.0
  %1589 = vmatpush1.msra.mxu0 %v1525
  %1590 = vmatprep.subr.mxu0 0.0
  %1591 = vmatpush1.msra.mxu0 %v1526
  %1592 = vmatprep.subr.mxu0 0.0
  %1593 = vmatpush1.msra.mxu0 %v1527
  %1594 = vmatprep.subr.mxu0 0.0
  %1595 = vmatpush1.msra.mxu0 %v1528
  %1596 = vmatprep.subr.mxu0 0.0
  %1597 = vmatpush1.msra.mxu0 %v1529
  %1598 = vmatprep.subr.mxu0 0.0
  %1599 = vmatpush1.msra.mxu0 %v1530
  %1600 = vmatprep.subr.mxu0 0.0
  %1601 = vmatpush1.msra.mxu0 %v1531
  %1602 = vmatprep.subr.mxu0 0.0
  %1603 = vmatpush1.msra.mxu0 %v1532
  %1604 = vmatprep.subr.mxu0 0.0
  %1605 = vmatpush1.msra.mxu0 %v1533
  %1606 = vmatprep.subr.mxu0 0.0
  %1607 = vmatpush1.msra.mxu0 %v1534
  %1608 = vmatprep.subr.mxu0 0.0
  %1609 = vmatpush1.msra.mxu0 %v1535
  %1610 = vmatprep.subr.mxu0 0.0
  %1611 = vmatpush1.msra.mxu0 %v1536
  %1612 = vmatprep.subr.mxu0 0.0
  %1613 = vmatpush1.msra.mxu0 %v1537
  %1614 = vmatprep.subr.mxu0 0.0
  %1615 = vmatpush1.msra.mxu0 %v1538
  %1616 = vmatprep.subr.mxu0 0.0
  %1617 = vmatpush1.msra.mxu0 %v1539
  %1618 = vmatprep.subr.mxu0 0.0
  %1619 = vmatpush1.msra.mxu0 %v1540
  %1620 = vmatprep.subr.mxu0 0.0
  %1621 = vmatpush1.msra.mxu0 %v1541
  %1622 = vmatprep.subr.mxu0 0.0
  %1623 = vmatpush1.msra.mxu0 %v1542
  %1624 = vmatprep.subr.mxu0 0.0
  %1625 = vmatpush1.msra.mxu0 %v1543
  %1626 = vmatprep.subr.mxu0 0.0
  %1627 = vmatpush1.msra.mxu0 %v1544
  %1628 = vmatprep.subr.mxu0 0.0
  %1629 = vmatpush1.msra.mxu0 %v1545
  %1630 = vmatprep.subr.mxu0 0.0
  %1631 = vmatpush1.msra.mxu0 %v1546
  %1632 = vmatprep.subr.mxu0 0.0
  %1633 = vmatpush1.msra.mxu0 %v1547
  %1634 = vmatprep.subr.mxu0 0.0
  %1635 = vmatpush1.msra.mxu0 %v1548
  %1636 = vmatprep.mubr.f32.mxu0 %v1506
  %1637 = vmatmul.mubr.f32.gmra.mrb[0].mxu0 %v1505
  %v1638 = vpop.f32.mrb[0].mxu0
  %v1639 = vadd.f32 0.0, %v1638
  %v1640 = vpop.f32.mrb[0].mxu0
  %1641 = vmatprep.mubr.f32.mxu0 %v1509
  %1642 = vmatmul.mubr.f32.gmra.mrb[0].mxu0 %v1508
  %v1643 = vpop.f32.mrb[0].mxu0
  %v1644 = vadd.f32 0.0, %v1643
  %v1645 = vpop.f32.mrb[0].mxu0
  %1646 = vmatprep.mubr.f32.mxu0 %v1512
  %1647 = vmatmul.mubr.f32.gmra.mrb[0].mxu0 %v1511
  %v1648 = vpop.f32.mrb[0].mxu0
  %v1649 = vadd.f32 0.0, %v1648
  %v1650 = vpop.f32.mrb[0].mxu0
  %1651 = vmatprep.mubr.f32.mxu0 %v1515
  %1652 = vmatmul.mubr.f32.gmra.mrb[0].mxu0 %v1514
  %v1653 = vpop.f32.mrb[0].mxu0
  %v1654 = vadd.f32 0.0, %v1653
  %v1655 = vpop.f32.mrb[0].mxu0
  %1656 = vdwg.mxu0
  %1657 = vmatprep.subr.mxu0 0.0
  %1658 = vmatpush1.msra.mxu0 %v1549
  %1659 = vmatprep.subr.mxu0 0.0
  %1660 = vmatpush1.msra.mxu0 %v1550
  %1661 = vmatprep.subr.mxu0 0.0
  %1662 = vmatpush1.msra.mxu0 %v1551
  %1663 = vmatprep.subr.mxu0 0.0
  %1664 = vmatpush1.msra.mxu0 %v1552
  %1665 = vmatprep.subr.mxu0 0.0
  %1666 = vmatpush1.msra.mxu0 %v1553
  %1667 = vmatprep.subr.mxu0 0.0
  %1668 = vmatpush1.msra.mxu0 %v1570
  %1669 = vmatprep.subr.mxu0 0.0
  %1670 = vmatpush1.msra.mxu0 0.0
  %1671 = vmatprep.subr.mxu0 0.0
  %1672 = vmatpush1.msra.mxu0 0.0
  %1673 = vmatprep.subr.mxu0 0.0
  %1674 = vmatpush1.msra.mxu0 0.0
  %1675 = vmatprep.subr.mxu0 0.0
  %1676 = vmatpush1.msra.mxu0 0.0
  %1677 = vmatprep.subr.mxu0 0.0
  %1678 = vmatpush1.msra.mxu0 0.0
  %1679 = vmatprep.subr.mxu0 0.0
  %1680 = vmatpush1.msra.mxu0 0.0
  %1681 = vmatprep.subr.mxu0 0.0
  %1682 = vmatpush1.msra.mxu0 0.0
  %1683 = vmatprep.subr.mxu0 0.0
  %1684 = vmatpush1.msra.mxu0 0.0
  %1685 = vmatprep.subr.mxu0 0.0
  %1686 = vmatpush1.msra.mxu0 0.0
  %1687 = vmatprep.subr.mxu0 0.0
  %1688 = vmatpush1.msra.mxu0 0.0
  %1689 = vmatprep.subr.mxu0 0.0
  %1690 = vmatpush1.msra.mxu0 0.0
  %1691 = vmatprep.subr.mxu0 0.0
  %1692 = vmatpush1.msra.mxu0 0.0
  %1693 = vmatprep.subr.mxu0 0.0
  %1694 = vmatpush1.msra.mxu0 0.0
  %1695 = vmatprep.subr.mxu0 0.0
  %1696 = vmatpush1.msra.mxu0 0.0
  %1697 = vmatprep.subr.mxu0 0.0
  %1698 = vmatpush1.msra.mxu0 0.0
  %1699 = vmatprep.subr.mxu0 0.0
  %1700 = vmatpush1.msra.mxu0 0.0
  %1701 = vmatprep.subr.mxu0 0.0
  %1702 = vmatpush1.msra.mxu0 0.0
  %1703 = vmatprep.subr.mxu0 0.0
  %1704 = vmatpush1.msra.mxu0 0.0
  %1705 = vmatprep.subr.mxu0 0.0
  %1706 = vmatpush1.msra.mxu0 0.0
  %1707 = vmatprep.subr.mxu0 0.0
  %1708 = vmatpush1.msra.mxu0 0.0
  %1709 = vmatprep.subr.mxu0 0.0
  %1710 = vmatpush1.msra.mxu0 0.0
  %1711 = vmatprep.subr.mxu0 0.0
  %1712 = vmatpush1.msra.mxu0 0.0
  %1713 = vmatprep.subr.mxu0 0.0
  %1714 = vmatpush1.msra.mxu0 0.0
  %1715 = vmatprep.subr.mxu0 0.0
  %1716 = vmatpush1.msra.mxu0 0.0
  %1717 = vmatprep.subr.mxu0 0.0
  %1718 = vmatpush1.msra.mxu0 0.0
  %1719 = vmatprep.subr.mxu0 0.0
  %1720 = vmatpush1.msra.mxu0 0.0
  %1721 = vmatprep.mubr.f32.mxu0 0.0
  %1722 = vmatmul.mubr.f32.gmra.mrb[0].mxu0 %v1557
  %v1723 = vpop.f32.mrb[0].mxu0
  %v1724 = vadd.f32 %v1639, %v1723
  %v1725 = vpop.f32.mrb[0].mxu0
  %1726 = vmatprep.mubr.f32.mxu0 0.0
  %1727 = vmatmul.mubr.f32.gmra.mrb[0].mxu0 %v1560
  %v1728 = vpop.f32.mrb[0].mxu0
  %v1729 = vadd.f32 %v1644, %v1728
  %v1730 = vpop.f32.mrb[0].mxu0
  %1731 = vmatprep.mubr.f32.mxu0 0.0
  %1732 = vmatmul.mubr.f32.gmra.mrb[0].mxu0 %v1563
  %v1733 = vpop.f32.mrb[0].mxu0
  %v1734 = vadd.f32 %v1649, %v1733
  %v1735 = vpop.f32.mrb[0].mxu0
  %1736 = vmatprep.mubr.f32.mxu0 0.0
  %1737 = vmatmul.mubr.f32.gmra.mrb[0].mxu0 %v1566
  %v1738 = vpop.f32.mrb[0].mxu0
  %v1739 = vadd.f32 %v1654, %v1738
  %v1740 = vpop.f32.mrb[0].mxu0
  %1741 = vdwg.mxu0
  %1746 = vrot.lane.b32.xlu0 %v1724, 127
  %v1747 = vpop.permute.xlu0 %1746
  %1748 = vrot.lane.b32.xlu0 %v1729, 127
  %v1749 = vpop.permute.xlu0 %1748
  %1750 = vrot.lane.b32.xlu0 %v1734, 127
  %v1751 = vpop.permute.xlu0 %1750
  %1752 = vrot.lane.b32.xlu0 %v1739, 127
  %v1753 = vpop.permute.xlu0 %1752
  %1758 = vrot.lane.b32.xlu0 %v1724, 47
  %v1759 = vpop.permute.xlu0 %1758
  %1760 = vrot.lane.b32.xlu0 %v1729, 47
  %v1761 = vpop.permute.xlu0 %1760
  %1762 = vrot.lane.b32.xlu0 %v1734, 47
  %v1763 = vpop.permute.xlu0 %1762
  %1764 = vrot.lane.b32.xlu0 %v1739, 47
  %v1765 = vpop.permute.xlu0 %1764
  %vm1770 = vcmask 384000
  %v1771 = vsel %vm1770, %v1747, %v1759
  %v1772 = vsel %vm1770, %v1749, %v1761
  %v1773 = vsel %vm1770, %v1751, %v1763
  %v1774 = vsel %vm1770, %v1753, %v1765
  %1775 = vrot.lane.b32.xlu0 %v1724, 126
  %v1776 = vpop.permute.xlu0 %1775
  %1777 = vrot.lane.b32.xlu0 %v1729, 126
  %v1778 = vpop.permute.xlu0 %1777
  %1779 = vrot.lane.b32.xlu0 %v1734, 126
  %v1780 = vpop.permute.xlu0 %1779
  %1781 = vrot.lane.b32.xlu0 %v1739, 126
  %v1782 = vpop.permute.xlu0 %1781
  %1787 = vrot.lane.b32.xlu0 %v1724, 46
  %v1788 = vpop.permute.xlu0 %1787
  %1789 = vrot.lane.b32.xlu0 %v1729, 46
  %v1790 = vpop.permute.xlu0 %1789
  %1791 = vrot.lane.b32.xlu0 %v1734, 46
  %v1792 = vpop.permute.xlu0 %1791
  %1793 = vrot.lane.b32.xlu0 %v1739, 46
  %v1794 = vpop.permute.xlu0 %1793
  %vm1799 = vcmask 375808
  %v1800 = vsel %vm1799, %v1776, %v1788
  %v1801 = vsel %vm1799, %v1778, %v1790
  %v1802 = vsel %vm1799, %v1780, %v1792
  %v1803 = vsel %vm1799, %v1782, %v1794
  %v1804 = vld [vmem:[%s3] sm:$0xff]
  %v1805 = vld [vmem:[%s3 + $0x8] sm:$0xff]
  %v1806 = vld [vmem:[%s4] sm:$0xff]
  %v1807 = vld [vmem:[%s4 + $0x8] sm:$0xff]
  %1809 = vset.pattern.permute.xlu0 0
  %1810 = vperm.xlu0 %1809, %v1806
  %v1811 = vpop.permute.xlu0 %1810
  %1814 = vset.pattern.permute.xlu0 0
  %1815 = vperm.xlu0 %1814, %v1807
  %v1816 = vpop.permute.xlu0 %1815
  %vm1818 = vcmask 785408
  %v1820 = vsel %vm1818, %v1804, 0
  %v1823 = vsel %vm1818, %v1805, 0
  %1825 = vmatprep.subr.mxu0 0.0
  %1826 = vmatpush1.msra.mxu0 %v1724
  %1827 = vmatprep.subr.mxu0 0.0
  %1828 = vmatpush1.msra.mxu0 %v1729
  %1829 = vmatprep.subr.mxu0 0.0
  %1830 = vmatpush1.msra.mxu0 %v1734
  %1831 = vmatprep.subr.mxu0 0.0
  %1832 = vmatpush1.msra.mxu0 %v1739
  %1833 = vmatprep.subr.mxu0 0.0
  %1834 = vmatpush1.msra.mxu0 %v1771
  %1835 = vmatprep.subr.mxu0 0.0
  %1836 = vmatpush1.msra.mxu0 %v1772
  %1837 = vmatprep.subr.mxu0 0.0
  %1838 = vmatpush1.msra.mxu0 %v1773
  %1839 = vmatprep.subr.mxu0 0.0
  %1840 = vmatpush1.msra.mxu0 %v1774
  %1841 = vmatprep.subr.mxu0 0.0
  %1842 = vmatpush1.msra.mxu0 %v1800
  %1843 = vmatprep.subr.mxu0 0.0
  %1844 = vmatpush1.msra.mxu0 %v1801
  %1845 = vmatprep.subr.mxu0 0.0
  %1846 = vmatpush1.msra.mxu0 %v1802
  %1847 = vmatprep.subr.mxu0 0.0
  %1848 = vmatpush1.msra.mxu0 %v1803
  %1849 = vmatprep.subr.mxu0 0.0
  %1850 = vmatpush1.msra.mxu0 0.0
  %1851 = vmatprep.subr.mxu0 0.0
  %1852 = vmatpush1.msra.mxu0 0.0
  %1853 = vmatprep.subr.mxu0 0.0
  %1854 = vmatpush1.msra.mxu0 0.0
  %1855 = vmatprep.subr.mxu0 0.0
  %1856 = vmatpush1.msra.mxu0 0.0
  %1857 = vmatprep.subr.mxu0 0.0
  %1858 = vmatpush1.msra.mxu0 0.0
  %1859 = vmatprep.subr.mxu0 0.0
  %1860 = vmatpush1.msra.mxu0 0.0
  %1861 = vmatprep.subr.mxu0 0.0
  %1862 = vmatpush1.msra.mxu0 0.0
  %1863 = vmatprep.subr.mxu0 0.0
  %1864 = vmatpush1.msra.mxu0 0.0
  %1865 = vmatprep.subr.mxu0 0.0
  %1866 = vmatpush1.msra.mxu0 0.0
  %1867 = vmatprep.subr.mxu0 0.0
  %1868 = vmatpush1.msra.mxu0 0.0
  %1869 = vmatprep.subr.mxu0 0.0
  %1870 = vmatpush1.msra.mxu0 0.0
  %1871 = vmatprep.subr.mxu0 0.0
  %1872 = vmatpush1.msra.mxu0 0.0
  %1873 = vmatprep.subr.mxu0 0.0
  %1874 = vmatpush1.msra.mxu0 0.0
  %1875 = vmatprep.subr.mxu0 0.0
  %1876 = vmatpush1.msra.mxu0 0.0
  %1877 = vmatprep.subr.mxu0 0.0
  %1878 = vmatpush1.msra.mxu0 0.0
  %1879 = vmatprep.subr.mxu0 0.0
  %1880 = vmatpush1.msra.mxu0 0.0
  %1881 = vmatprep.subr.mxu0 0.0
  %1882 = vmatpush1.msra.mxu0 0.0
  %1883 = vmatprep.subr.mxu0 0.0
  %1884 = vmatpush1.msra.mxu0 0.0
  %1885 = vmatprep.subr.mxu0 0.0
  %1886 = vmatpush1.msra.mxu0 0.0
  %1887 = vmatprep.subr.mxu0 0.0
  %1888 = vmatpush1.msra.mxu0 0.0
  %1889 = vmatprep.mubr.f32.mxu0 0.0
  %1890 = vmatmul.mubr.f32.gmra.mrb[0].mxu0 %v1820
  %v1891 = vpop.f32.mrb[0].mxu0
  %v1892 = vadd.f32 %v1811, %v1891
  %v1893 = vpop.f32.mrb[0].mxu0
  %1894 = vmatprep.mubr.f32.mxu0 0.0
  %1895 = vmatmul.mubr.f32.gmra.mrb[0].mxu0 %v1823
  %v1896 = vpop.f32.mrb[0].mxu0
  %v1897 = vadd.f32 %v1816, %v1896
  %v1898 = vpop.f32.mrb[0].mxu0
  %1899 = vdwg.mxu0
  %v1900 = vmax.f32 %v1892, 0.0
  %v1901 = vmax.f32 %v1897, 0.0
  %1904 = vrot.lane.b32.xlu0 %v1900, 127
  %v1905 = vpop.permute.xlu0 %1904
  %1906 = vrot.lane.b32.xlu0 %v1901, 127
  %v1907 = vpop.permute.xlu0 %1906
  %1910 = vrot.lane.b32.xlu0 %v1900, 47
  %v1911 = vpop.permute.xlu0 %1910
  %1912 = vrot.lane.b32.xlu0 %v1901, 47
  %v1913 = vpop.permute.xlu0 %1912
  %v1916 = vsel %vm1770, %v1905, %v1911
  %v1917 = vsel %vm1770, %v1907, %v1913
  %v1918 = vmax.f32 %v1900, %v1916
  %v1919 = vmax.f32 %v1901, %v1917
  %v1920 = vld [vmem:[%s12] sm:$0xff]
  %v1921 = vld [vmem:[%s12 + $0x8] sm:$0xff]
  %v1922 = vld [vmem:[%s12 + $0x10] sm:$0xff]
  %v1923 = vld [vmem:[%s12 + $0x18] sm:$0xff]
  %v1924 = vld [vmem:[%s12 + $0x20] sm:$0xff]
  %v1925 = vld [vmem:[%s12 + $0x28] sm:$0xff]
  %vm1926 = vcmask 392192
  %v1928 = vsel %vm1926, %v1918, 0
  %v1931 = vsel %vm1926, %v1919, 0
  %1933 = vmatprep.subr.mxu0 0.0
  %1934 = vmatpush1.msra.mxu0 %v1920
  %1935 = vmatprep.subr.mxu0 0.0
  %1936 = vmatpush1.msra.mxu0 %v1921
  %1937 = vmatprep.subr.mxu0 0.0
  %1938 = vmatpush1.msra.mxu0 %v1922
  %1939 = vmatprep.subr.mxu0 0.0
  %1940 = vmatpush1.msra.mxu0 %v1923
  %1941 = vmatprep.subr.mxu0 0.0
  %1942 = vmatpush1.msra.mxu0 %v1924
  %1943 = vmatprep.subr.mxu0 0.0
  %1944 = vmatpush1.msra.mxu0 %v1925
  %1945 = vmatprep.subr.mxu0 0.0
  %1946 = vmatpush1.msra.mxu0 0.0
  %1947 = vmatprep.subr.mxu0 0.0
  %1948 = vmatpush1.msra.mxu0 0.0
  %1949 = vmatprep.subr.mxu0 0.0
  %1950 = vmatpush1.msra.mxu0 0.0
  %1951 = vmatprep.subr.mxu0 0.0
  %1952 = vmatpush1.msra.mxu0 0.0
  %1953 = vmatprep.subr.mxu0 0.0
  %1954 = vmatpush1.msra.mxu0 0.0
  %1955 = vmatprep.subr.mxu0 0.0
  %1956 = vmatpush1.msra.mxu0 0.0
  %1957 = vmatprep.subr.mxu0 0.0
  %1958 = vmatpush1.msra.mxu0 0.0
  %1959 = vmatprep.subr.mxu0 0.0
  %1960 = vmatpush1.msra.mxu0 0.0
  %1961 = vmatprep.subr.mxu0 0.0
  %1962 = vmatpush1.msra.mxu0 0.0
  %1963 = vmatprep.subr.mxu0 0.0
  %1964 = vmatpush1.msra.mxu0 0.0
  %1965 = vmatprep.subr.mxu0 0.0
  %1966 = vmatpush1.msra.mxu0 0.0
  %1967 = vmatprep.subr.mxu0 0.0
  %1968 = vmatpush1.msra.mxu0 0.0
  %1969 = vmatprep.subr.mxu0 0.0
  %1970 = vmatpush1.msra.mxu0 0.0
  %1971 = vmatprep.subr.mxu0 0.0
  %1972 = vmatpush1.msra.mxu0 0.0
  %1973 = vmatprep.subr.mxu0 0.0
  %1974 = vmatpush1.msra.mxu0 0.0
  %1975 = vmatprep.subr.mxu0 0.0
  %1976 = vmatpush1.msra.mxu0 0.0
  %1977 = vmatprep.subr.mxu0 0.0
  %1978 = vmatpush1.msra.mxu0 0.0
  %1979 = vmatprep.subr.mxu0 0.0
  %1980 = vmatpush1.msra.mxu0 0.0
  %1981 = vmatprep.subr.mxu0 0.0
  %1982 = vmatpush1.msra.mxu0 0.0
  %1983 = vmatprep.subr.mxu0 0.0
  %1984 = vmatpush1.msra.mxu0 0.0
  %1985 = vmatprep.subr.mxu0 0.0
  %1986 = vmatpush1.msra.mxu0 0.0
  %1987 = vmatprep.subr.mxu0 0.0
  %1988 = vmatpush1.msra.mxu0 0.0
  %1989 = vmatprep.subr.mxu0 0.0
  %1990 = vmatpush1.msra.mxu0 0.0
  %1991 = vmatprep.subr.mxu0 0.0
  %1992 = vmatpush1.msra.mxu0 0.0
  %1993 = vmatprep.subr.mxu0 0.0
  %1994 = vmatpush1.msra.mxu0 0.0
  %1995 = vmatprep.subr.mxu0 0.0
  %1996 = vmatpush1.msra.mxu0 0.0
  %1997 = vmatprep.mubr.f32.mxu0 0.0
  %1998 = vmatmul.mubr.f32.gmra.mrb[0].mxu0 %v1928
  %v1999 = vpop.f32.mrb[0].mxu0
  %v2000 = vadd.f32 0.0, %v1999
  %v2001 = vpop.f32.mrb[0].mxu0
  %2002 = vmatprep.mubr.f32.mxu0 0.0
  %2003 = vmatmul.mubr.f32.gmra.mrb[0].mxu0 %v1931
  %v2004 = vpop.f32.mrb[0].mxu0
  %v2005 = vadd.f32 0.0, %v2004
  %v2006 = vpop.f32.mrb[0].mxu0
  %2007 = vdwg.mxu0
  %2010 = vrot.lane.b32.xlu0 %v2000, 127
  %v2011 = vpop.permute.xlu0 %2010
  %2012 = vrot.lane.b32.xlu0 %v2005, 127
  %v2013 = vpop.permute.xlu0 %2012
  %2016 = vrot.lane.b32.xlu0 %v2000, 21
  %v2017 = vpop.permute.xlu0 %2016
  %2018 = vrot.lane.b32.xlu0 %v2005, 21
  %v2019 = vpop.permute.xlu0 %2018
  %vm2022 = vcmask 171008
  %v2023 = vsel %vm2022, %v2011, %v2017
  %v2024 = vsel %vm2022, %v2013, %v2019
  %2025 = vrot.lane.b32.xlu0 %v2000, 126
  %v2026 = vpop.permute.xlu0 %2025
  %2027 = vrot.lane.b32.xlu0 %v2005, 126
  %v2028 = vpop.permute.xlu0 %2027
  %2031 = vrot.lane.b32.xlu0 %v2000, 20
  %v2032 = vpop.permute.xlu0 %2031
  %2033 = vrot.lane.b32.xlu0 %v2005, 20
  %v2034 = vpop.permute.xlu0 %2033
  %vm2037 = vcmask 162816
  %v2038 = vsel %vm2037, %v2026, %v2032
  %v2039 = vsel %vm2037, %v2028, %v2034
  %v2040 = vld [vmem:[%s5] sm:$0xff]
  %v2041 = vld [vmem:[%s5 + $0x8] sm:$0xff]
  %v2042 = vld [vmem:[%s6] sm:$0xff]
  %v2043 = vld [vmem:[%s6 + $0x8] sm:$0xff]
  %2045 = vset.pattern.permute.xlu0 0
  %2046 = vperm.xlu0 %2045, %v2042
  %v2047 = vpop.permute.xlu0 %2046
  %2050 = vset.pattern.permute.xlu0 0
  %2051 = vperm.xlu0 %2050, %v2043
  %v2052 = vpop.permute.xlu0 %2051
  %v2055 = vsel %vm1926, %v2040, 0
  %v2058 = vsel %vm1926, %v2041, 0
  %2060 = vmatprep.subr.mxu0 0.0
  %2061 = vmatpush1.msra.mxu0 %v2000
  %2062 = vmatprep.subr.mxu0 0.0
  %2063 = vmatpush1.msra.mxu0 %v2005
  %2064 = vmatprep.subr.mxu0 0.0
  %2065 = vmatpush1.msra.mxu0 %v2023
  %2066 = vmatprep.subr.mxu0 0.0
  %2067 = vmatpush1.msra.mxu0 %v2024
  %2068 = vmatprep.subr.mxu0 0.0
  %2069 = vmatpush1.msra.mxu0 %v2038
  %2070 = vmatprep.subr.mxu0 0.0
  %2071 = vmatpush1.msra.mxu0 %v2039
  %2072 = vmatprep.subr.mxu0 0.0
  %2073 = vmatpush1.msra.mxu0 0.0
  %2074 = vmatprep.subr.mxu0 0.0
  %2075 = vmatpush1.msra.mxu0 0.0
  %2076 = vmatprep.subr.mxu0 0.0
  %2077 = vmatpush1.msra.mxu0 0.0
  %2078 = vmatprep.subr.mxu0 0.0
  %2079 = vmatpush1.msra.mxu0 0.0
  %2080 = vmatprep.subr.mxu0 0.0
  %2081 = vmatpush1.msra.mxu0 0.0
  %2082 = vmatprep.subr.mxu0 0.0
  %2083 = vmatpush1.msra.mxu0 0.0
  %2084 = vmatprep.subr.mxu0 0.0
  %2085 = vmatpush1.msra.mxu0 0.0
  %2086 = vmatprep.subr.mxu0 0.0
  %2087 = vmatpush1.msra.mxu0 0.0
  %2088 = vmatprep.subr.mxu0 0.0
  %2089 = vmatpush1.msra.mxu0 0.0
  %2090 = vmatprep.subr.mxu0 0.0
  %2091 = vmatpush1.msra.mxu0 0.0
  %2092 = vmatprep.subr.mxu0 0.0
  %2093 = vmatpush1.msra.mxu0 0.0
  %2094 = vmatprep.subr.mxu0 0.0
  %2095 = vmatpush1.msra.mxu0 0.0
  %2096 = vmatprep.subr.mxu0 0.0
  %2097 = vmatpush1.msra.mxu0 0.0
  %2098 = vmatprep.subr.mxu0 0.0
  %2099 = vmatpush1.msra.mxu0 0.0
  %2100 = vmatprep.subr.mxu0 0.0
  %2101 = vmatpush1.msra.mxu0 0.0
  %2102 = vmatprep.subr.mxu0 0.0
  %2103 = vmatpush1.msra.mxu0 0.0
  %2104 = vmatprep.subr.mxu0 0.0
  %2105 = vmatpush1.msra.mxu0 0.0
  %2106 = vmatprep.subr.mxu0 0.0
  %2107 = vmatpush1.msra.mxu0 0.0
  %2108 = vmatprep.subr.mxu0 0.0
  %2109 = vmatpush1.msra.mxu0 0.0
  %2110 = vmatprep.subr.mxu0 0.0
  %2111 = vmatpush1.msra.mxu0 0.0
  %2112 = vmatprep.subr.mxu0 0.0
  %2113 = vmatpush1.msra.mxu0 0.0
  %2114 = vmatprep.subr.mxu0 0.0
  %2115 = vmatpush1.msra.mxu0 0.0
  %2116 = vmatprep.subr.mxu0 0.0
  %2117 = vmatpush1.msra.mxu0 0.0
  %2118 = vmatprep.subr.mxu0 0.0
  %2119 = vmatpush1.msra.mxu0 0.0
  %2120 = vmatprep.subr.mxu0 0.0
  %2121 = vmatpush1.msra.mxu0 0.0
  %2122 = vmatprep.subr.mxu0 0.0
  %2123 = vmatpush1.msra.mxu0 0.0
  %2124 = vmatprep.mubr.f32.mxu0 0.0
  %2125 = vmatmul.mubr.f32.gmra.mrb[0].mxu0 %v2055
  %v2126 = vpop.f32.mrb[0].mxu0
  %v2127 = vadd.f32 %v2047, %v2126
  %v2128 = vpop.f32.mrb[0].mxu0
  %2129 = vmatprep.mubr.f32.mxu0 0.0
  %2130 = vmatmul.mubr.f32.gmra.mrb[0].mxu0 %v2058
  %v2131 = vpop.f32.mrb[0].mxu0
  %v2132 = vadd.f32 %v2052, %v2131
  %v2133 = vpop.f32.mrb[0].mxu0
  %2134 = vdwg.mxu0
  %v2135 = vmax.f32 %v2127, 0.0
  %v2136 = vmax.f32 %v2132, 0.0
  %2139 = vrot.lane.b32.xlu0 %v2135, 127
  %v2140 = vpop.permute.xlu0 %2139
  %2141 = vrot.lane.b32.xlu0 %v2136, 127
  %v2142 = vpop.permute.xlu0 %2141
  %2145 = vrot.lane.b32.xlu0 %v2135, 21
  %v2146 = vpop.permute.xlu0 %2145
  %2147 = vrot.lane.b32.xlu0 %v2136, 21
  %v2148 = vpop.permute.xlu0 %2147
  %v2151 = vsel %vm2022, %v2140, %v2146
  %v2152 = vsel %vm2022, %v2142, %v2148
  %v2153 = vmax.f32 %v2135, %v2151
  %v2154 = vmax.f32 %v2136, %v2152
  %v2155 = vld [vmem:[%s13] sm:$0xff]
  %v2156 = vld [vmem:[%s13 + $0x8] sm:$0xff]
  %v2157 = vld [vmem:[%s13 + $0x10] sm:$0x3f]
  %v2159 = vsel %vm78, %v2153, 0
  %v2162 = vsel %vm78, %v2154, 0
  %v2165 = vsel %vm110, %v2157, 0
  %2167 = vmatprep.subr.mxu0 0.0
  %2168 = vmatpush1.msra.mxu0 %v2155
  %2169 = vmatprep.subr.mxu0 0.0
  %2170 = vmatpush1.msra.mxu0 %v2156
  %2171 = vmatprep.subr.mxu0 0.0
  %2172 = vmatpush1.msra.mxu0 %v2165
  %2173 = vmatprep.subr.mxu0 0.0
  %2174 = vmatpush1.msra.mxu0 0.0
  %2175 = vmatprep.subr.mxu0 0.0
  %2176 = vmatpush1.msra.mxu0 0.0
  %2177 = vmatprep.subr.mxu0 0.0
  %2178 = vmatpush1.msra.mxu0 0.0
  %2179 = vmatprep.subr.mxu0 0.0
  %2180 = vmatpush1.msra.mxu0 0.0
  %2181 = vmatprep.subr.mxu0 0.0
  %2182 = vmatpush1.msra.mxu0 0.0
  %2183 = vmatprep.subr.mxu0 0.0
  %2184 = vmatpush1.msra.mxu0 0.0
  %2185 = vmatprep.subr.mxu0 0.0
  %2186 = vmatpush1.msra.mxu0 0.0
  %2187 = vmatprep.subr.mxu0 0.0
  %2188 = vmatpush1.msra.mxu0 0.0
  %2189 = vmatprep.subr.mxu0 0.0
  %2190 = vmatpush1.msra.mxu0 0.0
  %2191 = vmatprep.subr.mxu0 0.0
  %2192 = vmatpush1.msra.mxu0 0.0
  %2193 = vmatprep.subr.mxu0 0.0
  %2194 = vmatpush1.msra.mxu0 0.0
  %2195 = vmatprep.subr.mxu0 0.0
  %2196 = vmatpush1.msra.mxu0 0.0
  %2197 = vmatprep.subr.mxu0 0.0
  %2198 = vmatpush1.msra.mxu0 0.0
  %2199 = vmatprep.subr.mxu0 0.0
  %2200 = vmatpush1.msra.mxu0 0.0
  %2201 = vmatprep.subr.mxu0 0.0
  %2202 = vmatpush1.msra.mxu0 0.0
  %2203 = vmatprep.subr.mxu0 0.0
  %2204 = vmatpush1.msra.mxu0 0.0
  %2205 = vmatprep.subr.mxu0 0.0
  %2206 = vmatpush1.msra.mxu0 0.0
  %2207 = vmatprep.subr.mxu0 0.0
  %2208 = vmatpush1.msra.mxu0 0.0
  %2209 = vmatprep.subr.mxu0 0.0
  %2210 = vmatpush1.msra.mxu0 0.0
  %2211 = vmatprep.subr.mxu0 0.0
  %2212 = vmatpush1.msra.mxu0 0.0
  %2213 = vmatprep.subr.mxu0 0.0
  %2214 = vmatpush1.msra.mxu0 0.0
  %2215 = vmatprep.subr.mxu0 0.0
  %2216 = vmatpush1.msra.mxu0 0.0
  %2217 = vmatprep.subr.mxu0 0.0
  %2218 = vmatpush1.msra.mxu0 0.0
  %2219 = vmatprep.subr.mxu0 0.0
  %2220 = vmatpush1.msra.mxu0 0.0
  %2221 = vmatprep.subr.mxu0 0.0
  %2222 = vmatpush1.msra.mxu0 0.0
  %2223 = vmatprep.subr.mxu0 0.0
  %2224 = vmatpush1.msra.mxu0 0.0
  %2225 = vmatprep.subr.mxu0 0.0
  %2226 = vmatpush1.msra.mxu0 0.0
  %2227 = vmatprep.subr.mxu0 0.0
  %2228 = vmatpush1.msra.mxu0 0.0
  %2229 = vmatprep.subr.mxu0 0.0
  %2230 = vmatpush1.msra.mxu0 0.0
  %2231 = vmatprep.mubr.f32.mxu0 0.0
  %2232 = vmatmul.mubr.f32.gmra.mrb[0].mxu0 %v2159
  %v2233 = vpop.f32.mrb[0].mxu0
  %v2234 = vadd.f32 0.0, %v2233
  %v2235 = vpop.f32.mrb[0].mxu0
  %2236 = vmatprep.mubr.f32.mxu0 0.0
  %2237 = vmatmul.mubr.f32.gmra.mrb[0].mxu0 %v2162
  %v2238 = vpop.f32.mrb[0].mxu0
  %v2239 = vadd.f32 0.0, %v2238
  %v2240 = vpop.f32.mrb[0].mxu0
  %2241 = vdwg.mxu0
  %2244 = vrot.lane.b32.xlu0 %v2234, 126
  %v2245 = vpop.permute.xlu0 %2244
  %2246 = vrot.lane.b32.xlu0 %v2239, 126
  %v2247 = vpop.permute.xlu0 %2246
  %2250 = vrot.lane.b32.xlu0 %v2234, 124
  %v2251 = vpop.permute.xlu0 %2250
  %2252 = vrot.lane.b32.xlu0 %v2239, 124
  %v2253 = vpop.permute.xlu0 %2252
  %2256 = vrot.lane.b32.xlu0 %v2234, 122
  %v2257 = vpop.permute.xlu0 %2256
  %2258 = vrot.lane.b32.xlu0 %v2239, 122
  %v2259 = vpop.permute.xlu0 %2258
  %v2262 = vld [vmem:[%s7] sm:$0xff]
  %v2263 = vld [vmem:[%s7 + $0x8] sm:$0xff]
  %v2264 = vld [vmem:[%s7 + $0x10] sm:$0xff]
  %v2265 = vld [vmem:[%s7 + $0x18] sm:$0xff]
  %v2266 = vld [vmem:[%s8] sm:$0xff]
  %v2267 = vld [vmem:[%s8 + $0x8] sm:$0xff]
  %v2268 = vld [vmem:[%s8 + $0x10] sm:$0xff]
  %v2269 = vld [vmem:[%s8 + $0x18] sm:$0xff]
  %2271 = vset.pattern.permute.xlu0 0
  %2272 = vperm.xlu0 %2271, %v2266
  %v2273 = vpop.permute.xlu0 %2272
  %2276 = vset.pattern.permute.xlu0 0
  %2277 = vperm.xlu0 %2276, %v2267
  %v2278 = vpop.permute.xlu0 %2277
  %2281 = vset.pattern.permute.xlu0 0
  %2282 = vperm.xlu0 %2281, %v2268
  %v2283 = vpop.permute.xlu0 %2282
  %2286 = vset.pattern.permute.xlu0 0
  %2287 = vperm.xlu0 %2286, %v2269
  %v2288 = vpop.permute.xlu0 %2287
  %vm2290 = vcmask 523264
  %v2292 = vsel %vm2290, %v2262, 0
  %v2295 = vsel %vm2290, %v2263, 0
  %v2298 = vsel %vm2290, %v2264, 0
  %v2301 = vsel %vm2290, %v2265, 0
  %2303 = vmatprep.subr.mxu0 0.0
  %2304 = vmatpush1.msra.mxu0 %v2234
  %2305 = vmatprep.subr.mxu0 0.0
  %2306 = vmatpush1.msra.mxu0 %v2239
  %2307 = vmatprep.subr.mxu0 0.0
  %2308 = vmatpush1.msra.mxu0 %v2245
  %2309 = vmatprep.subr.mxu0 0.0
  %2310 = vmatpush1.msra.mxu0 %v2247
  %2311 = vmatprep.subr.mxu0 0.0
  %2312 = vmatpush1.msra.mxu0 %v2251
  %2313 = vmatprep.subr.mxu0 0.0
  %2314 = vmatpush1.msra.mxu0 %v2253
  %2315 = vmatprep.subr.mxu0 0.0
  %2316 = vmatpush1.msra.mxu0 %v2257
  %2317 = vmatprep.subr.mxu0 0.0
  %2318 = vmatpush1.msra.mxu0 %v2259
  %2319 = vmatprep.subr.mxu0 0.0
  %2320 = vmatpush1.msra.mxu0 0.0
  %2321 = vmatprep.subr.mxu0 0.0
  %2322 = vmatpush1.msra.mxu0 0.0
  %2323 = vmatprep.subr.mxu0 0.0
  %2324 = vmatpush1.msra.mxu0 0.0
  %2325 = vmatprep.subr.mxu0 0.0
  %2326 = vmatpush1.msra.mxu0 0.0
  %2327 = vmatprep.subr.mxu0 0.0
  %2328 = vmatpush1.msra.mxu0 0.0
  %2329 = vmatprep.subr.mxu0 0.0
  %2330 = vmatpush1.msra.mxu0 0.0
  %2331 = vmatprep.subr.mxu0 0.0
  %2332 = vmatpush1.msra.mxu0 0.0
  %2333 = vmatprep.subr.mxu0 0.0
  %2334 = vmatpush1.msra.mxu0 0.0
  %2335 = vmatprep.subr.mxu0 0.0
  %2336 = vmatpush1.msra.mxu0 0.0
  %2337 = vmatprep.subr.mxu0 0.0
  %2338 = vmatpush1.msra.mxu0 0.0
  %2339 = vmatprep.subr.mxu0 0.0
  %2340 = vmatpush1.msra.mxu0 0.0
  %2341 = vmatprep.subr.mxu0 0.0
  %2342 = vmatpush1.msra.mxu0 0.0
  %2343 = vmatprep.subr.mxu0 0.0
  %2344 = vmatpush1.msra.mxu0 0.0
  %2345 = vmatprep.subr.mxu0 0.0
  %2346 = vmatpush1.msra.mxu0 0.0
  %2347 = vmatprep.subr.mxu0 0.0
  %2348 = vmatpush1.msra.mxu0 0.0
  %2349 = vmatprep.subr.mxu0 0.0
  %2350 = vmatpush1.msra.mxu0 0.0
  %2351 = vmatprep.subr.mxu0 0.0
  %2352 = vmatpush1.msra.mxu0 0.0
  %2353 = vmatprep.subr.mxu0 0.0
  %2354 = vmatpush1.msra.mxu0 0.0
  %2355 = vmatprep.subr.mxu0 0.0
  %2356 = vmatpush1.msra.mxu0 0.0
  %2357 = vmatprep.subr.mxu0 0.0
  %2358 = vmatpush1.msra.mxu0 0.0
  %2359 = vmatprep.subr.mxu0 0.0
  %2360 = vmatpush1.msra.mxu0 0.0
  %2361 = vmatprep.subr.mxu0 0.0
  %2362 = vmatpush1.msra.mxu0 0.0
  %2363 = vmatprep.subr.mxu0 0.0
  %2364 = vmatpush1.msra.mxu0 0.0
  %2365 = vmatprep.subr.mxu0 0.0
  %2366 = vmatpush1.msra.mxu0 0.0
  %2367 = vmatprep.mubr.f32.mxu0 0.0
  %2368 = vmatmul.mubr.f32.gmra.mrb[0].mxu0 %v2292
  %v2369 = vpop.f32.mrb[0].mxu0
  %v2370 = vadd.f32 %v2273, %v2369
  %v2371 = vpop.f32.mrb[0].mxu0
  %2372 = vmatprep.mubr.f32.mxu0 0.0
  %2373 = vmatmul.mubr.f32.gmra.mrb[0].mxu0 %v2295
  %v2374 = vpop.f32.mrb[0].mxu0
  %v2375 = vadd.f32 %v2278, %v2374
  %v2376 = vpop.f32.mrb[0].mxu0
  %2377 = vmatprep.mubr.f32.mxu0 0.0
  %2378 = vmatmul.mubr.f32.gmra.mrb[0].mxu0 %v2298
  %v2379 = vpop.f32.mrb[0].mxu0
  %v2380 = vadd.f32 %v2283, %v2379
  %v2381 = vpop.f32.mrb[0].mxu0
  %2382 = vmatprep.mubr.f32.mxu0 0.0
  %2383 = vmatmul.mubr.f32.gmra.mrb[0].mxu0 %v2301
  %v2384 = vpop.f32.mrb[0].mxu0
  %v2385 = vadd.f32 %v2288, %v2384
  %v2386 = vpop.f32.mrb[0].mxu0
  %2387 = vdwg.mxu0
  %v2388 = vmax.f32 %v2370, 0.0
  %v2389 = vmax.f32 %v2375, 0.0
  %v2390 = vmax.f32 %v2380, 0.0
  %v2391 = vmax.f32 %v2385, 0.0
  %v2392 = vld [vmem:[%s9] sm:$0x7]
  %v2393 = vld [vmem:[%s10] sm:$0x7]
  %2395 = vset.pattern.permute.xlu0 0
  %2396 = vperm.xlu0 %2395, %v2393
  %v2397 = vpop.permute.xlu0 %2396
  %vm2399 = vcmask 261120
  %v2401 = vsel %vm2399, %v2392, 0
  %2403 = vmatprep.subr.mxu0 0.0
  %2404 = vmatpush1.msra.mxu0 %v2388
  %2405 = vmatprep.subr.mxu0 0.0
  %2406 = vmatpush1.msra.mxu0 %v2389
  %2407 = vmatprep.subr.mxu0 0.0
  %2408 = vmatpush1.msra.mxu0 %v2390
  %2409 = vmatprep.subr.mxu0 0.0
  %2410 = vmatpush1.msra.mxu0 %v2391
  %2411 = vmatprep.subr.mxu0 0.0
  %2412 = vmatpush1.msra.mxu0 0.0
  %2413 = vmatprep.subr.mxu0 0.0
  %2414 = vmatpush1.msra.mxu0 0.0
  %2415 = vmatprep.subr.mxu0 0.0
  %2416 = vmatpush1.msra.mxu0 0.0
  %2417 = vmatprep.subr.mxu0 0.0
  %2418 = vmatpush1.msra.mxu0 0.0
  %2419 = vmatprep.subr.mxu0 0.0
  %2420 = vmatpush1.msra.mxu0 0.0
  %2421 = vmatprep.subr.mxu0 0.0
  %2422 = vmatpush1.msra.mxu0 0.0
  %2423 = vmatprep.subr.mxu0 0.0
  %2424 = vmatpush1.msra.mxu0 0.0
  %2425 = vmatprep.subr.mxu0 0.0
  %2426 = vmatpush1.msra.mxu0 0.0
  %2427 = vmatprep.subr.mxu0 0.0
  %2428 = vmatpush1.msra.mxu0 0.0
  %2429 = vmatprep.subr.mxu0 0.0
  %2430 = vmatpush1.msra.mxu0 0.0
  %2431 = vmatprep.subr.mxu0 0.0
  %2432 = vmatpush1.msra.mxu0 0.0
  %2433 = vmatprep.subr.mxu0 0.0
  %2434 = vmatpush1.msra.mxu0 0.0
  %2435 = vmatprep.subr.mxu0 0.0
  %2436 = vmatpush1.msra.mxu0 0.0
  %2437 = vmatprep.subr.mxu0 0.0
  %2438 = vmatpush1.msra.mxu0 0.0
  %2439 = vmatprep.subr.mxu0 0.0
  %2440 = vmatpush1.msra.mxu0 0.0
  %2441 = vmatprep.subr.mxu0 0.0
  %2442 = vmatpush1.msra.mxu0 0.0
  %2443 = vmatprep.subr.mxu0 0.0
  %2444 = vmatpush1.msra.mxu0 0.0
  %2445 = vmatprep.subr.mxu0 0.0
  %2446 = vmatpush1.msra.mxu0 0.0
  %2447 = vmatprep.subr.mxu0 0.0
  %2448 = vmatpush1.msra.mxu0 0.0
  %2449 = vmatprep.subr.mxu0 0.0
  %2450 = vmatpush1.msra.mxu0 0.0
  %2451 = vmatprep.subr.mxu0 0.0
  %2452 = vmatpush1.msra.mxu0 0.0
  %2453 = vmatprep.subr.mxu0 0.0
  %2454 = vmatpush1.msra.mxu0 0.0
  %2455 = vmatprep.subr.mxu0 0.0
  %2456 = vmatpush1.msra.mxu0 0.0
  %2457 = vmatprep.subr.mxu0 0.0
  %2458 = vmatpush1.msra.mxu0 0.0
  %2459 = vmatprep.subr.mxu0 0.0
  %2460 = vmatpush1.msra.mxu0 0.0
  %2461 = vmatprep.subr.mxu0 0.0
  %2462 = vmatpush1.msra.mxu0 0.0
  %2463 = vmatprep.subr.mxu0 0.0
  %2464 = vmatpush1.msra.mxu0 0.0
  %2465 = vmatprep.subr.mxu0 0.0
  %2466 = vmatpush1.msra.mxu0 0.0
  %2467 = vmatprep.mubr.f32.mxu0 0.0
  %2468 = vmatmul.mubr.f32.gmra.mrb[0].mxu0 %v2401
  %v2469 = vpop.f32.mrb[0].mxu0
  %v2470 = vadd.f32 %v2397, %v2469
  %v2471 = vpop.f32.mrb[0].mxu0
  %2472 = vdwg.mxu0
  %vm2473 = vcmask 10240
  %2474 = vst.msk [vmem:[%s14] sm:$0x7] %vm2473, %v2470
  // Predicated region
  $region58: #{_net1_forward_impl.1} parent=0 // pred_check
    _
  $region59: #{_net1_forward_impl.1} parent=0 // pred_check_branch
    %2476 = sbr.rel (0) target = $region61
  $region60: #{_net1_forward_impl.1} parent=0 // pred_region
    _
  $region61: #{_net1_forward_impl.1} parent=0 // pred_fallthru
    _
  // Predicated region
  $region62: #{_net1_forward_impl.1} parent=0 // pred_check
    _
  $region63: #{_net1_forward_impl.1} parent=0 // pred_check_branch
    %2478 = sbr.rel (0) target = $region65
  $region64: #{_net1_forward_impl.1} parent=0 // pred_region
    _
  $region65: #{_net1_forward_impl.1} parent=0 // pred_fallthru
    _

</llo_original>
